<compile_context>
chip_gen: v7x
topology: tpu7x:2x2x1
jax: 0.10.0
libtpu: 0.0.40
codegen_flags: <defaults>
</compile_context>

<pallas_src>
import math
from functools import partial

import jax
import jax.numpy as jnp
from jax.experimental import pallas as pl
from jax.experimental.pallas import tpu as pltpu


# ---------------------------------------------------------------------------
# Parameter preparation (one-time transform, not per call)
# ---------------------------------------------------------------------------
def prepare_mha_params(params, num_heads, compute_dtype=None):
    """Pre-transpose weights, fold the 1/sqrt(head_dim) scale into Wq/bq and
    optionally cast weights to a lower-precision compute dtype (e.g. bf16)."""
    E = params["out_proj_weight"].shape[0]
    head_dim = E // num_heads
    scale = 1.0 / math.sqrt(head_dim)
    cdt = compute_dtype if compute_dtype is not None else params["in_proj_weight"].dtype

    W = params["in_proj_weight"]          # (3E, E)
    b = params["in_proj_bias"]            # (3E,)
    wq, wk, wv = W[:E], W[E:2 * E], W[2 * E:]
    return {
        "wq_t": (wq.T * scale).astype(cdt),            # (E, E), scale folded in
        "wk_t": wk.T.astype(cdt),
        "wv_t": wv.T.astype(cdt),
        "wo_t": params["out_proj_weight"].T.astype(cdt),
        "bq": (b[:E] * scale).reshape(1, E).astype(jnp.float32),
        "bk": b[E:2 * E].reshape(1, E).astype(jnp.float32),
        "bv": b[2 * E:].reshape(1, E).astype(jnp.float32),
        "bo": params["out_proj_bias"].reshape(1, E).astype(jnp.float32),
    }


# ---------------------------------------------------------------------------
# Tile-size helpers
# ---------------------------------------------------------------------------
def _pick_seq_block(dim, target):
    """Largest legal tile (multiple of 8 dividing dim, or the full dim)."""
    if dim <= target:
        return dim
    best = 0
    for c in range(8, target + 1, 8):
        if dim % c == 0:
            best = c
    return best if best > 0 else dim


def _pick_batch_block(n, tile_l, tile_kv):
    """Pack several batch rows per grid step so the MXU M-dim is large."""
    if (tile_l % 8 != 0) or (tile_kv % 8 != 0):
        return 1  # keep reshapes layout-preserving
    target = max(1, 256 // tile_l)
    for c in range(min(n, target), 0, -1):
        if n % c == 0:
            return c
    return 1


def _compiler_params(dims):
    kwargs = dict(dimension_semantics=dims)
    try:
        cap = pltpu.get_tpu_info().vmem_capacity_bytes
        # half of physical VMEM, capped at 64 MiB (safe on v5e/v6e/v7x)
        kwargs["vmem_limit_bytes"] = int(min(cap // 2, 64 * 1024 * 1024))
    except Exception:
        pass
    return pltpu.CompilerParams(**kwargs)


# ---------------------------------------------------------------------------
# Kernel A: flash-style (online softmax), S-tiled -- need_weights=False path
#   grid = (N/BN, L/tL, S/tS), dims ("parallel", "parallel", "arbitrary")
# ---------------------------------------------------------------------------
def _mha_flash_kernel(q_ref, k_ref, v_ref,
                      wq_ref, wk_ref, wv_ref,
                      bq_ref, bk_ref, bv_ref,
                      wo_ref, bo_ref,
                      out_ref,
                      qp_ref, kp_ref, vp_ref, m_ref, l_ref, acc_ref,
                      *, num_heads):
    BN, tL, E = q_ref.shape
    tS = k_ref.shape[1]
    hd = E // num_heads
    cdt = wq_ref.dtype

    si = pl.program_id(2)
    ns = pl.num_programs(2)

    @pl.when(si == 0)
    def _init():
        # Q projection once per (batch, L) tile; scale already folded into Wq/bq.
        q2 = q_ref[...].reshape(BN * tL, E).astype(cdt)
        qp = jnp.dot(q2, wq_ref[...], preferred_element_type=jnp.float32) + bq_ref[...]
        qp_ref[...] = qp.reshape(BN, tL, E).astype(cdt)
        m_ref[...] = jnp.full(m_ref.shape, -jnp.inf, m_ref.dtype)
        l_ref[...] = jnp.zeros(l_ref.shape, l_ref.dtype)
        acc_ref[...] = jnp.zeros(acc_ref.shape, acc_ref.dtype)

    # K/V projection for this S tile (large-M matmul over BN*tS rows).
    k2 = k_ref[...].reshape(BN * tS, E).astype(cdt)
    v2 = v_ref[...].reshape(BN * tS, E).astype(cdt)
    kp = jnp.dot(k2, wk_ref[...], preferred_element_type=jnp.float32) + bk_ref[...]
    vp = jnp.dot(v2, wv_ref[...], preferred_element_type=jnp.float32) + bv_ref[...]
    kp_ref[...] = kp.reshape(BN, tS, E).astype(cdt)
    vp_ref[...] = vp.reshape(BN, tS, E).astype(cdt)

    # Per-head online softmax; all head outputs land in the acc scratch slab.
    for h in range(num_heads):
        lo = h * hd
        qh = qp_ref[:, :, lo:lo + hd]             # (BN, tL, hd)
        kh = kp_ref[:, :, lo:lo + hd]             # (BN, tS, hd)
        vh = vp_ref[:, :, lo:lo + hd]             # (BN, tS, hd)

        s = jnp.einsum('bld,bsd->bls', qh, kh,
                       preferred_element_type=jnp.float32)          # (BN, tL, tS)
        m_old = m_ref[:, :, h:h + 1]                                 # (BN, tL, 1)
        m_new = jnp.maximum(m_old, jnp.max(s, axis=-1, keepdims=True))
        alpha = jnp.exp(m_old - m_new)
        p = jnp.exp(s - m_new)

        l_ref[:, :, h:h + 1] = alpha * l_ref[:, :, h:h + 1] + \
            jnp.sum(p, axis=-1, keepdims=True)
        acc_ref[:, :, lo:lo + hd] = alpha * acc_ref[:, :, lo:lo + hd] + \
            jnp.einsum('bls,bsd->bld', p.astype(cdt), vh,
                       preferred_element_type=jnp.float32)
        m_ref[:, :, h:h + 1] = m_new

    @pl.when(si == ns - 1)
    def _finalize():
        for h in range(num_heads):
            lo = h * hd
            inv = pl.reciprocal(l_ref[:, :, h:h + 1], approx=True)
            acc_ref[:, :, lo:lo + hd] = acc_ref[:, :, lo:lo + hd] * inv
        a2 = acc_ref[...].reshape(BN * tL, E).astype(cdt)
        out = jnp.dot(a2, wo_ref[...], preferred_element_type=jnp.float32) + bo_ref[...]
        out_ref[...] = out.reshape(BN, tL, E).astype(out_ref.dtype)


# ---------------------------------------------------------------------------
# Kernel B: emits head-averaged attention weights -- need_weights=True path
#   grid = (N/BN, L/tL), full S resident (weights are O(L*S) anyway)
#   The L axis is "arbitrary": the projected K/V for a batch block are computed
#   once (at the first L tile) and reused from persistent VMEM scratch.
# ---------------------------------------------------------------------------
def _mha_weights_kernel(q_ref, k_ref, v_ref,
                        wq_ref, wk_ref, wv_ref,
                        bq_ref, bk_ref, bv_ref,
                        wo_ref, bo_ref,
                        out_ref, aw_ref,
                        qp_ref, kp_ref, vp_ref, acc_ref, ws_ref,
                        *, num_heads):
    BN, tL, E = q_ref.shape
    S = k_ref.shape[1]
    hd = E // num_heads
    cdt = wq_ref.dtype

    li = pl.program_id(1)

    # K/V projection shared by every L tile of this batch block: compute only
    # on the first L tile; kp_ref / vp_ref persist across grid steps.
    @pl.when(li == 0)
    def _project_kv():
        k2 = k_ref[...].reshape(BN * S, E).astype(cdt)
        v2 = v_ref[...].reshape(BN * S, E).astype(cdt)
        kp_ref[...] = (jnp.dot(k2, wk_ref[...], preferred_element_type=jnp.float32)
                       + bk_ref[...]).reshape(BN, S, E).astype(cdt)
        vp_ref[...] = (jnp.dot(v2, wv_ref[...], preferred_element_type=jnp.float32)
                       + bv_ref[...]).reshape(BN, S, E).astype(cdt)

    # Q projection per (batch, L) tile as one big (rows, E) matmul.
    q2 = q_ref[...].reshape(BN * tL, E).astype(cdt)
    qp_ref[...] = (jnp.dot(q2, wq_ref[...], preferred_element_type=jnp.float32)
                   + bq_ref[...]).reshape(BN, tL, E).astype(cdt)
    ws_ref[...] = jnp.zeros(ws_ref.shape, ws_ref.dtype)

    for h in range(num_heads):
        lo = h * hd
        qh = qp_ref[:, :, lo:lo + hd]
        kh = kp_ref[:, :, lo:lo + hd]
        vh = vp_ref[:, :, lo:lo + hd]

        s = jnp.einsum('bld,bsd->bls', qh, kh,
                       preferred_element_type=jnp.float32)          # (BN, tL, S)
        s = s - jnp.max(s, axis=-1, keepdims=True)
        p = jnp.exp(s)
        p = p * pl.reciprocal(jnp.sum(p, axis=-1, keepdims=True), approx=True)

        ws_ref[...] += p
        acc_ref[:, :, lo:lo + hd] = jnp.einsum(
            'bls,bsd->bld', p.astype(cdt), vh, preferred_element_type=jnp.float32)

    a2 = acc_ref[...].reshape(BN * tL, E).astype(cdt)
    out = jnp.dot(a2, wo_ref[...], preferred_element_type=jnp.float32) + bo_ref[...]
    out_ref[...] = out.reshape(BN, tL, E).astype(out_ref.dtype)
    aw_ref[...] = (ws_ref[...] * (1.0 / num_heads)).astype(aw_ref.dtype)


# ---------------------------------------------------------------------------
# Public wrapper (PyTorch layout: (L, N, E) unless batch_first=True)
# ---------------------------------------------------------------------------
def multihead_attention(query, key, value, prepared, *, num_heads,
                        need_weights=True, batch_first=False,
                        block_l=128, block_s=512):
    if batch_first:
        q_b, k_b, v_b = query, key, value
    else:
        q_b = jnp.transpose(query, (1, 0, 2))   # (N, L, E)
        k_b = jnp.transpose(key, (1, 0, 2))     # (N, S, E)
        v_b = jnp.transpose(value, (1, 0, 2))

    N, L, E = q_b.shape
    S = k_b.shape[1]
    assert E % num_heads == 0

    wq_t, wk_t, wv_t, wo_t = (prepared["wq_t"], prepared["wk_t"],
                              prepared["wv_t"], prepared["wo_t"])
    bq, bk, bv, bo = prepared["bq"], prepared["bk"], prepared["bv"], prepared["bo"]
    cdt = wq_t.dtype
    tL = _pick_seq_block(L, block_l)

    # NOTE: weight BlockSpecs use constant index_maps, so they are DMA'd only
    # once per grid sweep; on v7x one could additionally single-buffer them
    # (pipeline_mode=pl.Buffered(1)) to free VMEM at large E.
    if need_weights:
        BN = _pick_batch_block(N, tL, S)
        nb, nl = N // BN, L // tL
        kernel = partial(_mha_weights_kernel, num_heads=num_heads)
        wspec = lambda r, c: pl.BlockSpec((r, c), lambda b, l: (0, 0))

        out_b, aw = pl.pallas_call(
            kernel,
            out_shape=(
                jax.ShapeDtypeStruct((N, L, E), query.dtype),
                # weights in the input dtype (PyTorch semantics), lane dim = S
                jax.ShapeDtypeStruct((N, L, S), query.dtype),
            ),
            grid_spec=pltpu.PrefetchScalarGridSpec(
                num_scalar_prefetch=0,
                grid=(nb, nl),
                in_specs=[
                    pl.BlockSpec((BN, tL, E), lambda b, l: (b, l, 0)),
                    pl.BlockSpec((BN, S, E), lambda b, l: (b, 0, 0)),
                    pl.BlockSpec((BN, S, E), lambda b, l: (b, 0, 0)),
                    wspec(E, E), wspec(E, E), wspec(E, E),
                    wspec(1, E), wspec(1, E), wspec(1, E),
                    wspec(E, E), wspec(1, E),
                ],
                out_specs=[
                    pl.BlockSpec((BN, tL, E), lambda b, l: (b, l, 0)),
                    pl.BlockSpec((BN, tL, S), lambda b, l: (b, l, 0)),
                ],
                scratch_shapes=[
                    pltpu.VMEM((BN, tL, E), cdt),          # projected Q
                    pltpu.VMEM((BN, S, E), cdt),           # projected K (cached over L tiles)
                    pltpu.VMEM((BN, S, E), cdt),           # projected V (cached over L tiles)
                    pltpu.VMEM((BN, tL, E), jnp.float32),  # head-output slab
                    pltpu.VMEM((BN, tL, S), jnp.float32),  # summed weights
                ]),
            # L axis is "arbitrary" so the K/V-projection cache is valid
            # (sequential L tiles per batch block); batch stays "parallel".
            compiler_params=_compiler_params(("parallel", "arbitrary")),
        )(q_b, k_b, v_b, wq_t, wk_t, wv_t, bq, bk, bv, wo_t, bo)
    else:
        tS = _pick_seq_block(S, block_s)
        BN = _pick_batch_block(N, tL, tS)
        nb, nl, ns = N // BN, L // tL, S // tS
        kernel = partial(_mha_flash_kernel, num_heads=num_heads)
        wspec3 = lambda r, c: pl.BlockSpec((r, c), lambda b, l, s: (0, 0))

        out_b = pl.pallas_call(
            kernel,
            out_shape=jax.ShapeDtypeStruct((N, L, E), query.dtype),
            grid_spec=pltpu.PrefetchScalarGridSpec(
                num_scalar_prefetch=0,
                grid=(nb, nl, ns),
                in_specs=[
                    pl.BlockSpec((BN, tL, E), lambda b, l, s: (b, l, 0)),
                    pl.BlockSpec((BN, tS, E), lambda b, l, s: (b, s, 0)),
                    pl.BlockSpec((BN, tS, E), lambda b, l, s: (b, s, 0)),
                    wspec3(E, E), wspec3(E, E), wspec3(E, E),
                    wspec3(1, E), wspec3(1, E), wspec3(1, E),
                    wspec3(E, E), wspec3(1, E),
                ],
                out_specs=pl.BlockSpec((BN, tL, E), lambda b, l, s: (b, l, 0)),
                scratch_shapes=[
                    pltpu.VMEM((BN, tL, E), cdt),                 # projected Q
                    pltpu.VMEM((BN, tS, E), cdt),                 # projected K tile
                    pltpu.VMEM((BN, tS, E), cdt),                 # projected V tile
                    pltpu.VMEM((BN, tL, num_heads), jnp.float32),  # running max
                    pltpu.VMEM((BN, tL, num_heads), jnp.float32),  # running sum
                    pltpu.VMEM((BN, tL, E), jnp.float32),          # output accum
                ]),
            compiler_params=_compiler_params(("parallel", "parallel", "arbitrary")),
        )(q_b, k_b, v_b, wq_t, wk_t, wv_t, bq, bk, bv, wo_t, bo)
        aw = None

    attn_output = out_b if batch_first else jnp.transpose(out_b, (1, 0, 2))
    return attn_output, aw


# ---------------------------------------------------------------------------
# Deterministic parameter init (matching MultiheadAttention._reset_parameters)
# ---------------------------------------------------------------------------
def init_params(key, embed_dim):
    k1, k2 = jax.random.split(key)
    limit_in = math.sqrt(6.0 / (3 * embed_dim + embed_dim))     # xavier_uniform_
    in_proj_weight = jax.random.uniform(
        k1, (3 * embed_dim, embed_dim), jnp.float32, -limit_in, limit_in)
    in_proj_bias = jnp.zeros((3 * embed_dim,), jnp.float32)
    limit_out = 1.0 / math.sqrt(embed_dim)
    out_proj_weight = jax.random.uniform(
        k2, (embed_dim, embed_dim), jnp.float32, -limit_out, limit_out)
    out_proj_bias = jnp.zeros((embed_dim,), jnp.float32)
    return {
        "in_proj_weight": in_proj_weight,
        "in_proj_bias": in_proj_bias,
        "out_proj_weight": out_proj_weight,
        "out_proj_bias": out_proj_bias,
    }


# ---------------------------------------------------------------------------
# Pure-JAX reference (mirrors F.multi_head_attention_forward, no masks/dropout)
# ---------------------------------------------------------------------------
def reference_mha(query, key, value, params, *, num_heads):
    L, N, E = query.shape
    S = key.shape[0]
    hd = E // num_heads
    W = params["in_proj_weight"]
    b = params["in_proj_bias"]
    wq, wk, wv = W[:E], W[E:2 * E], W[2 * E:]
    bq, bk, bv = b[:E], b[E:2 * E], b[2 * E:]

    q = query @ wq.T + bq
    k = key @ wk.T + bk
    v = value @ wv.T + bv

    q = q.reshape(L, N * num_heads, hd).transpose(1, 0, 2) / math.sqrt(hd)
    k = k.reshape(S, N * num_heads, hd).transpose(1, 0, 2)
    v = v.reshape(S, N * num_heads, hd).transpose(1, 0, 2)

    scores = q @ k.transpose(0, 2, 1)
    attn = jax.nn.softmax(scores, axis=-1)
    out = attn @ v
    out = out.transpose(1, 0, 2).reshape(L, N, E)
    out = out @ params["out_proj_weight"].T + params["out_proj_bias"]
    attn_w = attn.reshape(N, num_heads, L, S).mean(axis=1)
    return out, attn_w


if __name__ == "__main__":
    # Small shapes: L = S = 8, batch N = 2, embed_dim E = 32, num_heads = 4
    L, S, N, E, H = 8, 8, 2, 32, 4

    root = jax.random.PRNGKey(0)
    kq, kk, kv, kpar = jax.random.split(root, 4)
    query = jax.random.normal(kq, (L, N, E), jnp.float32)
    key = jax.random.normal(kk, (S, N, E), jnp.float32)
    value = jax.random.normal(kv, (S, N, E), jnp.float32)

    params = init_params(kpar, E)
    # Use non-zero biases so the (scale-folded) bias path is actually verified.
    kb1, kb2 = jax.random.split(jax.random.PRNGKey(1))
    params["in_proj_bias"] = 0.1 * jax.random.normal(kb1, (3 * E,), jnp.float32)
    params["out_proj_bias"] = 0.1 * jax.random.normal(kb2, (E,), jnp.float32)

    ref_out, ref_w = reference_mha(query, key, value, params, num_heads=H)

    # --- default path: need_weights=True (f32 compute) ----------------------
    prepared = prepare_mha_params(params, num_heads=H)
    attn_out, attn_w = multihead_attention(query, key, value, prepared, num_heads=H)
    attn_out = jax.block_until_ready(attn_out)
    attn_w = jax.block_until_ready(attn_w)
    assert attn_out.shape == (L, N, E)
    assert attn_w.shape == (N, L, S)
    # tolerance accounts for the EUP approx-reciprocal softmax normalization
    assert jnp.allclose(attn_out, ref_out, atol=1e-2, rtol=1e-2)
    assert jnp.allclose(attn_w, ref_w, atol=2e-3, rtol=1e-2)

    # --- fast path: need_weights=False (flash / online-softmax, S-tiled) ----
    out2, aw2 = multihead_attention(query, key, value, prepared, num_heads=H,
                                    need_weights=False)
    out2 = jax.block_until_ready(out2)
    assert aw2 is None
    assert jnp.allclose(out2, ref_out, atol=1e-2, rtol=1e-2)

    # --- bf16-MXU compute path smoke test ------------------------------------
    prepared_bf16 = prepare_mha_params(params, num_heads=H,
                                       compute_dtype=jnp.bfloat16)
    out3, _ = multihead_attention(query, key, value, prepared_bf16, num_heads=H,
                                  need_weights=False)
    out3 = jax.block_until_ready(out3)
    assert out3.shape == (L, N, E)
    assert bool(jnp.all(jnp.isfinite(out3.astype(jnp.float32))))

    print("KERNEL_OK")
</pallas_src>

<mosaic_0001>
module attributes {stable_mosaic.version = 11 : i64} {
  func.func @_mha_weights_kernel(%arg0: i32, %arg1: i32, %arg2: memref<2x8x32xf32, #tpu.memory_space<vmem>>, %arg3: memref<2x8x32xf32, #tpu.memory_space<vmem>>, %arg4: memref<2x8x32xf32, #tpu.memory_space<vmem>>, %arg5: memref<32x32xf32, #tpu.memory_space<vmem>>, %arg6: memref<32x32xf32, #tpu.memory_space<vmem>>, %arg7: memref<32x32xf32, #tpu.memory_space<vmem>>, %arg8: memref<1x32xf32, #tpu.memory_space<vmem>>, %arg9: memref<1x32xf32, #tpu.memory_space<vmem>>, %arg10: memref<1x32xf32, #tpu.memory_space<vmem>>, %arg11: memref<32x32xf32, #tpu.memory_space<vmem>>, %arg12: memref<1x32xf32, #tpu.memory_space<vmem>>, %arg13: memref<2x8x32xf32, #tpu.memory_space<vmem>>, %arg14: memref<2x8x8xf32, #tpu.memory_space<vmem>>, %arg15: memref<2x8x32xf32, #tpu.memory_space<vmem>>, %arg16: memref<2x8x32xf32, #tpu.memory_space<vmem>>, %arg17: memref<2x8x32xf32, #tpu.memory_space<vmem>>, %arg18: memref<2x8x32xf32, #tpu.memory_space<vmem>>, %arg19: memref<2x8x8xf32, #tpu.memory_space<vmem>>) attributes {dimension_semantics = [#tpu.dimension_semantics<parallel>, #tpu.dimension_semantics<arbitrary>], iteration_bounds = array<i64: 1, 1>, scalar_prefetch = 0 : i64, scratch_operands = 5 : i64, tpu.core_type = #tpu.core_type<tc>, window_params = [{transform_indices = @transform_0, window_bounds = array<i64: 2, 8, 32>}, {transform_indices = @transform_1, window_bounds = array<i64: 2, 8, 32>}, {transform_indices = @transform_2, window_bounds = array<i64: 2, 8, 32>}, {pipeline_mode = #tpu.pipeline_mode<synchronous>, transform_indices = @transform_3, window_bounds = array<i64: 32, 32>}, {pipeline_mode = #tpu.pipeline_mode<synchronous>, transform_indices = @transform_4, window_bounds = array<i64: 32, 32>}, {pipeline_mode = #tpu.pipeline_mode<synchronous>, transform_indices = @transform_5, window_bounds = array<i64: 32, 32>}, {pipeline_mode = #tpu.pipeline_mode<synchronous>, transform_indices = @transform_6, window_bounds = array<i64: 1, 32>}, {pipeline_mode = #tpu.pipeline_mode<synchronous>, transform_indices = @transform_7, window_bounds = array<i64: 1, 32>}, {pipeline_mode = #tpu.pipeline_mode<synchronous>, transform_indices = @transform_8, window_bounds = array<i64: 1, 32>}, {pipeline_mode = #tpu.pipeline_mode<synchronous>, transform_indices = @transform_9, window_bounds = array<i64: 32, 32>}, {pipeline_mode = #tpu.pipeline_mode<synchronous>, transform_indices = @transform_10, window_bounds = array<i64: 1, 32>}, {transform_indices = @transform_11, window_bounds = array<i64: 2, 8, 32>}, {transform_indices = @transform_12, window_bounds = array<i64: 2, 8, 8>}]} {
    %c0_i32 = arith.constant 0 : i32
    %0 = arith.cmpi eq, %arg1, %c0_i32 : i32
    %1 = arith.extui %0 : i1 to i32
    %c0_i32_0 = arith.constant 0 : i32
    %2 = arith.cmpi ne, %1, %c0_i32_0 : i32
    scf.if %2 {
      %c0_117 = arith.constant 0 : index
      %c0_118 = arith.constant 0 : index
      %c0_119 = arith.constant 0 : index
      %103 = vector.load %arg3[%c0_117, %c0_118, %c0_119] : memref<2x8x32xf32, #tpu.memory_space<vmem>>, vector<2x8x32xf32>
      %104 = vector.shape_cast %103 : vector<2x8x32xf32> to vector<16x32xf32>
      %c0_120 = arith.constant 0 : index
      %c0_121 = arith.constant 0 : index
      %c0_122 = arith.constant 0 : index
      %105 = vector.load %arg4[%c0_120, %c0_121, %c0_122] : memref<2x8x32xf32, #tpu.memory_space<vmem>>, vector<2x8x32xf32>
      %106 = vector.shape_cast %105 : vector<2x8x32xf32> to vector<16x32xf32>
      %c0_123 = arith.constant 0 : index
      %c0_124 = arith.constant 0 : index
      %107 = vector.load %arg6[%c0_123, %c0_124] : memref<32x32xf32, #tpu.memory_space<vmem>>, vector<32x32xf32>
      %cst_125 = arith.constant dense<0.000000e+00> : vector<16x32xf32>
      %108 = tpu.matmul %104, %107, %cst_125 {dimension_numbers = #tpu.dot_dimension_numbers<[1], [0], [0], [1], [0, 0, 1, 1], [], []>} : vector<16x32xf32>, vector<32x32xf32>, vector<16x32xf32> -> vector<16x32xf32>
      %c0_126 = arith.constant 0 : index
      %c0_127 = arith.constant 0 : index
      %109 = vector.load %arg9[%c0_126, %c0_127] : memref<1x32xf32, #tpu.memory_space<vmem>>, vector<1x32xf32>
      %110 = vector.broadcast %109 : vector<1x32xf32> to vector<16x32xf32>
      %111 = arith.addf %108, %110 : vector<16x32xf32>
      %112 = vector.shape_cast %111 : vector<16x32xf32> to vector<2x8x32xf32>
      %c0_128 = arith.constant 0 : index
      %c0_129 = arith.constant 0 : index
      %c0_130 = arith.constant 0 : index
      %113 = vector.load %arg16[%c0_128, %c0_129, %c0_130] : memref<2x8x32xf32, #tpu.memory_space<vmem>>, vector<2x8x32xf32>
      tpu.vector_store %arg16[%c0_128, %c0_129, %c0_130], %112 {strides = array<i32>} : memref<2x8x32xf32, #tpu.memory_space<vmem>>, vector<2x8x32xf32>,
      %c0_131 = arith.constant 0 : index
      %c0_132 = arith.constant 0 : index
      %114 = vector.load %arg7[%c0_131, %c0_132] : memref<32x32xf32, #tpu.memory_space<vmem>>, vector<32x32xf32>
      %cst_133 = arith.constant dense<0.000000e+00> : vector<16x32xf32>
      %115 = tpu.matmul %106, %114, %cst_133 {dimension_numbers = #tpu.dot_dimension_numbers<[1], [0], [0], [1], [0, 0, 1, 1], [], []>} : vector<16x32xf32>, vector<32x32xf32>, vector<16x32xf32> -> vector<16x32xf32>
      %c0_134 = arith.constant 0 : index
      %c0_135 = arith.constant 0 : index
      %116 = vector.load %arg10[%c0_134, %c0_135] : memref<1x32xf32, #tpu.memory_space<vmem>>, vector<1x32xf32>
      %117 = vector.broadcast %116 : vector<1x32xf32> to vector<16x32xf32>
      %118 = arith.addf %115, %117 : vector<16x32xf32>
      %119 = vector.shape_cast %118 : vector<16x32xf32> to vector<2x8x32xf32>
      %c0_136 = arith.constant 0 : index
      %c0_137 = arith.constant 0 : index
      %c0_138 = arith.constant 0 : index
      %120 = vector.load %arg17[%c0_136, %c0_137, %c0_138] : memref<2x8x32xf32, #tpu.memory_space<vmem>>, vector<2x8x32xf32>
      tpu.vector_store %arg17[%c0_136, %c0_137, %c0_138], %119 {strides = array<i32>} : memref<2x8x32xf32, #tpu.memory_space<vmem>>, vector<2x8x32xf32>,
    } else {
    }
    %c0 = arith.constant 0 : index
    %c0_1 = arith.constant 0 : index
    %c0_2 = arith.constant 0 : index
    %3 = vector.load %arg2[%c0, %c0_1, %c0_2] : memref<2x8x32xf32, #tpu.memory_space<vmem>>, vector<2x8x32xf32>
    %4 = vector.shape_cast %3 : vector<2x8x32xf32> to vector<16x32xf32>
    %c0_3 = arith.constant 0 : index
    %c0_4 = arith.constant 0 : index
    %5 = vector.load %arg5[%c0_3, %c0_4] : memref<32x32xf32, #tpu.memory_space<vmem>>, vector<32x32xf32>
    %cst = arith.constant dense<0.000000e+00> : vector<16x32xf32>
    %6 = tpu.matmul %4, %5, %cst {dimension_numbers = #tpu.dot_dimension_numbers<[1], [0], [0], [1], [0, 0, 1, 1], [], []>} : vector<16x32xf32>, vector<32x32xf32>, vector<16x32xf32> -> vector<16x32xf32>
    %c0_5 = arith.constant 0 : index
    %c0_6 = arith.constant 0 : index
    %7 = vector.load %arg8[%c0_5, %c0_6] : memref<1x32xf32, #tpu.memory_space<vmem>>, vector<1x32xf32>
    %8 = vector.broadcast %7 : vector<1x32xf32> to vector<16x32xf32>
    %9 = arith.addf %6, %8 : vector<16x32xf32>
    %10 = vector.shape_cast %9 : vector<16x32xf32> to vector<2x8x32xf32>
    %c0_7 = arith.constant 0 : index
    %c0_8 = arith.constant 0 : index
    %c0_9 = arith.constant 0 : index
    %11 = vector.load %arg15[%c0_7, %c0_8, %c0_9] : memref<2x8x32xf32, #tpu.memory_space<vmem>>, vector<2x8x32xf32>
    tpu.vector_store %arg15[%c0_7, %c0_8, %c0_9], %10 {strides = array<i32>} : memref<2x8x32xf32, #tpu.memory_space<vmem>>, vector<2x8x32xf32>,
    %cst_10 = arith.constant 0.000000e+00 : f32
    %12 = vector.broadcast %cst_10 : f32 to vector<2x8x8xf32>
    %c0_11 = arith.constant 0 : index
    %c0_12 = arith.constant 0 : index
    %c0_13 = arith.constant 0 : index
    %13 = vector.load %arg19[%c0_11, %c0_12, %c0_13] : memref<2x8x8xf32, #tpu.memory_space<vmem>>, vector<2x8x8xf32>
    tpu.vector_store %arg19[%c0_11, %c0_12, %c0_13], %12 {strides = array<i32>} : memref<2x8x8xf32, #tpu.memory_space<vmem>>, vector<2x8x8xf32>,
    %c0_14 = arith.constant 0 : index
    %c0_15 = arith.constant 0 : index
    %c0_16 = arith.constant 0 : index
    %14 = vector.load %arg15[%c0_14, %c0_15, %c0_16] : memref<2x8x32xf32, #tpu.memory_space<vmem>>, vector<2x8x8xf32>
    %c0_17 = arith.constant 0 : index
    %c0_18 = arith.constant 0 : index
    %c0_19 = arith.constant 0 : index
    %15 = vector.load %arg16[%c0_17, %c0_18, %c0_19] : memref<2x8x32xf32, #tpu.memory_space<vmem>>, vector<2x8x8xf32>
    %c0_20 = arith.constant 0 : index
    %c0_21 = arith.constant 0 : index
    %c0_22 = arith.constant 0 : index
    %16 = vector.load %arg17[%c0_20, %c0_21, %c0_22] : memref<2x8x32xf32, #tpu.memory_space<vmem>>, vector<2x8x8xf32>
    "tpu.trace_start"() <{level = 10 : i32, message = "bld,bsd->bls"}> : () -> ()
    %cst_23 = arith.constant dense<0.000000e+00> : vector<2x8x8xf32>
    %17 = tpu.matmul %14, %15, %cst_23 {dimension_numbers = #tpu.dot_dimension_numbers<[2], [2], [1], [1], [0, 0, 0, 1, 1, 1], [0], [0]>} : vector<2x8x8xf32>, vector<2x8x8xf32>, vector<2x8x8xf32> -> vector<2x8x8xf32>
    "tpu.trace_stop"() : () -> ()
    %cst_24 = arith.constant dense<0xFF800000> : vector<2x8xf32>
    %18 = vector.multi_reduction <maximumf>, %17, %cst_24 [2] : vector<2x8x8xf32> to vector<2x8xf32>
    %19 = vector.shape_cast %18 : vector<2x8xf32> to vector<2x8x1xf32>
    %20 = vector.broadcast %19 : vector<2x8x1xf32> to vector<2x8x8xf32>
    %21 = arith.subf %17, %20 : vector<2x8x8xf32>
    %22 = math.exp %21 : vector<2x8x8xf32>
    %cst_25 = arith.constant dense<0.000000e+00> : vector<2x8xf32>
    %23 = vector.multi_reduction <add>, %22, %cst_25 [2] : vector<2x8x8xf32> to vector<2x8xf32>
    %24 = vector.shape_cast %23 : vector<2x8xf32> to vector<2x8x1xf32>
    %25 = tpu.reciprocal %24 {approx = true} : vector<2x8x1xf32> -> vector<2x8x1xf32>
    %26 = vector.broadcast %25 : vector<2x8x1xf32> to vector<2x8x8xf32>
    %27 = arith.mulf %22, %26 : vector<2x8x8xf32>
    %c0_26 = arith.constant 0 : index
    %c0_27 = arith.constant 0 : index
    %c0_28 = arith.constant 0 : index
    %28 = vector.load %arg19[%c0_26, %c0_27, %c0_28] : memref<2x8x8xf32, #tpu.memory_space<vmem>>, vector<2x8x8xf32>
    %29 = arith.addf %28, %27 : vector<2x8x8xf32>
    %c0_29 = arith.constant 0 : index
    %c0_30 = arith.constant 0 : index
    %c0_31 = arith.constant 0 : index
    %30 = vector.load %arg19[%c0_29, %c0_30, %c0_31] : memref<2x8x8xf32, #tpu.memory_space<vmem>>, vector<2x8x8xf32>
    tpu.vector_store %arg19[%c0_29, %c0_30, %c0_31], %29 {strides = array<i32>} : memref<2x8x8xf32, #tpu.memory_space<vmem>>, vector<2x8x8xf32>,
    "tpu.trace_start"() <{level = 10 : i32, message = "bls,bsd->bld"}> : () -> ()
    %cst_32 = arith.constant dense<0.000000e+00> : vector<2x8x8xf32>
    %31 = tpu.matmul %27, %16, %cst_32 {dimension_numbers = #tpu.dot_dimension_numbers<[2], [1], [1], [2], [0, 0, 0, 1, 1, 2], [0], [0]>} : vector<2x8x8xf32>, vector<2x8x8xf32>, vector<2x8x8xf32> -> vector<2x8x8xf32>
    "tpu.trace_stop"() : () -> ()
    %c0_33 = arith.constant 0 : index
    %c0_34 = arith.constant 0 : index
    %c0_35 = arith.constant 0 : index
    %32 = vector.load %arg18[%c0_33, %c0_34, %c0_35] : memref<2x8x32xf32, #tpu.memory_space<vmem>>, vector<2x8x8xf32>
    tpu.vector_store %arg18[%c0_33, %c0_34, %c0_35], %31 {strides = array<i32>} : memref<2x8x32xf32, #tpu.memory_space<vmem>>, vector<2x8x8xf32>,
    %c0_36 = arith.constant 0 : index
    %c0_37 = arith.constant 0 : index
    %c8 = arith.constant 8 : index
    %33 = vector.load %arg15[%c0_36, %c0_37, %c8] : memref<2x8x32xf32, #tpu.memory_space<vmem>>, vector<2x8x8xf32>
    %c0_38 = arith.constant 0 : index
    %c0_39 = arith.constant 0 : index
    %c8_40 = arith.constant 8 : index
    %34 = vector.load %arg16[%c0_38, %c0_39, %c8_40] : memref<2x8x32xf32, #tpu.memory_space<vmem>>, vector<2x8x8xf32>
    %c0_41 = arith.constant 0 : index
    %c0_42 = arith.constant 0 : index
    %c8_43 = arith.constant 8 : index
    %35 = vector.load %arg17[%c0_41, %c0_42, %c8_43] : memref<2x8x32xf32, #tpu.memory_space<vmem>>, vector<2x8x8xf32>
    "tpu.trace_start"() <{level = 10 : i32, message = "bld,bsd->bls"}> : () -> ()
    %cst_44 = arith.constant dense<0.000000e+00> : vector<2x8x8xf32>
    %36 = tpu.matmul %33, %34, %cst_44 {dimension_numbers = #tpu.dot_dimension_numbers<[2], [2], [1], [1], [0, 0, 0, 1, 1, 1], [0], [0]>} : vector<2x8x8xf32>, vector<2x8x8xf32>, vector<2x8x8xf32> -> vector<2x8x8xf32>
    "tpu.trace_stop"() : () -> ()
    %cst_45 = arith.constant dense<0xFF800000> : vector<2x8xf32>
    %37 = vector.multi_reduction <maximumf>, %36, %cst_45 [2] : vector<2x8x8xf32> to vector<2x8xf32>
    %38 = vector.shape_cast %37 : vector<2x8xf32> to vector<2x8x1xf32>
    %39 = vector.broadcast %38 : vector<2x8x1xf32> to vector<2x8x8xf32>
    %40 = arith.subf %36, %39 : vector<2x8x8xf32>
    %41 = math.exp %40 : vector<2x8x8xf32>
    %cst_46 = arith.constant dense<0.000000e+00> : vector<2x8xf32>
    %42 = vector.multi_reduction <add>, %41, %cst_46 [2] : vector<2x8x8xf32> to vector<2x8xf32>
    %43 = vector.shape_cast %42 : vector<2x8xf32> to vector<2x8x1xf32>
    %44 = tpu.reciprocal %43 {approx = true} : vector<2x8x1xf32> -> vector<2x8x1xf32>
    %45 = vector.broadcast %44 : vector<2x8x1xf32> to vector<2x8x8xf32>
    %46 = arith.mulf %41, %45 : vector<2x8x8xf32>
    %c0_47 = arith.constant 0 : index
    %c0_48 = arith.constant 0 : index
    %c0_49 = arith.constant 0 : index
    %47 = vector.load %arg19[%c0_47, %c0_48, %c0_49] : memref<2x8x8xf32, #tpu.memory_space<vmem>>, vector<2x8x8xf32>
    %48 = arith.addf %47, %46 : vector<2x8x8xf32>
    %c0_50 = arith.constant 0 : index
    %c0_51 = arith.constant 0 : index
    %c0_52 = arith.constant 0 : index
    %49 = vector.load %arg19[%c0_50, %c0_51, %c0_52] : memref<2x8x8xf32, #tpu.memory_space<vmem>>, vector<2x8x8xf32>
    tpu.vector_store %arg19[%c0_50, %c0_51, %c0_52], %48 {strides = array<i32>} : memref<2x8x8xf32, #tpu.memory_space<vmem>>, vector<2x8x8xf32>,
    "tpu.trace_start"() <{level = 10 : i32, message = "bls,bsd->bld"}> : () -> ()
    %cst_53 = arith.constant dense<0.000000e+00> : vector<2x8x8xf32>
    %50 = tpu.matmul %46, %35, %cst_53 {dimension_numbers = #tpu.dot_dimension_numbers<[2], [1], [1], [2], [0, 0, 0, 1, 1, 2], [0], [0]>} : vector<2x8x8xf32>, vector<2x8x8xf32>, vector<2x8x8xf32> -> vector<2x8x8xf32>
    "tpu.trace_stop"() : () -> ()
    %c0_54 = arith.constant 0 : index
    %c0_55 = arith.constant 0 : index
    %c8_56 = arith.constant 8 : index
    %51 = vector.load %arg18[%c0_54, %c0_55, %c8_56] : memref<2x8x32xf32, #tpu.memory_space<vmem>>, vector<2x8x8xf32>
    tpu.vector_store %arg18[%c0_54, %c0_55, %c8_56], %50 {strides = array<i32>} : memref<2x8x32xf32, #tpu.memory_space<vmem>>, vector<2x8x8xf32>,
    %c0_57 = arith.constant 0 : index
    %c0_58 = arith.constant 0 : index
    %c16 = arith.constant 16 : index
    %52 = vector.load %arg15[%c0_57, %c0_58, %c16] : memref<2x8x32xf32, #tpu.memory_space<vmem>>, vector<2x8x8xf32>
    %c0_59 = arith.constant 0 : index
    %c0_60 = arith.constant 0 : index
    %c16_61 = arith.constant 16 : index
    %53 = vector.load %arg16[%c0_59, %c0_60, %c16_61] : memref<2x8x32xf32, #tpu.memory_space<vmem>>, vector<2x8x8xf32>
    %c0_62 = arith.constant 0 : index
    %c0_63 = arith.constant 0 : index
    %c16_64 = arith.constant 16 : index
    %54 = vector.load %arg17[%c0_62, %c0_63, %c16_64] : memref<2x8x32xf32, #tpu.memory_space<vmem>>, vector<2x8x8xf32>
    "tpu.trace_start"() <{level = 10 : i32, message = "bld,bsd->bls"}> : () -> ()
    %cst_65 = arith.constant dense<0.000000e+00> : vector<2x8x8xf32>
    %55 = tpu.matmul %52, %53, %cst_65 {dimension_numbers = #tpu.dot_dimension_numbers<[2], [2], [1], [1], [0, 0, 0, 1, 1, 1], [0], [0]>} : vector<2x8x8xf32>, vector<2x8x8xf32>, vector<2x8x8xf32> -> vector<2x8x8xf32>
    "tpu.trace_stop"() : () -> ()
    %cst_66 = arith.constant dense<0xFF800000> : vector<2x8xf32>
    %56 = vector.multi_reduction <maximumf>, %55, %cst_66 [2] : vector<2x8x8xf32> to vector<2x8xf32>
    %57 = vector.shape_cast %56 : vector<2x8xf32> to vector<2x8x1xf32>
    %58 = vector.broadcast %57 : vector<2x8x1xf32> to vector<2x8x8xf32>
    %59 = arith.subf %55, %58 : vector<2x8x8xf32>
    %60 = math.exp %59 : vector<2x8x8xf32>
    %cst_67 = arith.constant dense<0.000000e+00> : vector<2x8xf32>
    %61 = vector.multi_reduction <add>, %60, %cst_67 [2] : vector<2x8x8xf32> to vector<2x8xf32>
    %62 = vector.shape_cast %61 : vector<2x8xf32> to vector<2x8x1xf32>
    %63 = tpu.reciprocal %62 {approx = true} : vector<2x8x1xf32> -> vector<2x8x1xf32>
    %64 = vector.broadcast %63 : vector<2x8x1xf32> to vector<2x8x8xf32>
    %65 = arith.mulf %60, %64 : vector<2x8x8xf32>
    %c0_68 = arith.constant 0 : index
    %c0_69 = arith.constant 0 : index
    %c0_70 = arith.constant 0 : index
    %66 = vector.load %arg19[%c0_68, %c0_69, %c0_70] : memref<2x8x8xf32, #tpu.memory_space<vmem>>, vector<2x8x8xf32>
    %67 = arith.addf %66, %65 : vector<2x8x8xf32>
    %c0_71 = arith.constant 0 : index
    %c0_72 = arith.constant 0 : index
    %c0_73 = arith.constant 0 : index
    %68 = vector.load %arg19[%c0_71, %c0_72, %c0_73] : memref<2x8x8xf32, #tpu.memory_space<vmem>>, vector<2x8x8xf32>
    tpu.vector_store %arg19[%c0_71, %c0_72, %c0_73], %67 {strides = array<i32>} : memref<2x8x8xf32, #tpu.memory_space<vmem>>, vector<2x8x8xf32>,
    "tpu.trace_start"() <{level = 10 : i32, message = "bls,bsd->bld"}> : () -> ()
    %cst_74 = arith.constant dense<0.000000e+00> : vector<2x8x8xf32>
    %69 = tpu.matmul %65, %54, %cst_74 {dimension_numbers = #tpu.dot_dimension_numbers<[2], [1], [1], [2], [0, 0, 0, 1, 1, 2], [0], [0]>} : vector<2x8x8xf32>, vector<2x8x8xf32>, vector<2x8x8xf32> -> vector<2x8x8xf32>
    "tpu.trace_stop"() : () -> ()
    %c0_75 = arith.constant 0 : index
    %c0_76 = arith.constant 0 : index
    %c16_77 = arith.constant 16 : index
    %70 = vector.load %arg18[%c0_75, %c0_76, %c16_77] : memref<2x8x32xf32, #tpu.memory_space<vmem>>, vector<2x8x8xf32>
    tpu.vector_store %arg18[%c0_75, %c0_76, %c16_77], %69 {strides = array<i32>} : memref<2x8x32xf32, #tpu.memory_space<vmem>>, vector<2x8x8xf32>,
    %c0_78 = arith.constant 0 : index
    %c0_79 = arith.constant 0 : index
    %c24 = arith.constant 24 : index
    %71 = vector.load %arg15[%c0_78, %c0_79, %c24] : memref<2x8x32xf32, #tpu.memory_space<vmem>>, vector<2x8x8xf32>
    %c0_80 = arith.constant 0 : index
    %c0_81 = arith.constant 0 : index
    %c24_82 = arith.constant 24 : index
    %72 = vector.load %arg16[%c0_80, %c0_81, %c24_82] : memref<2x8x32xf32, #tpu.memory_space<vmem>>, vector<2x8x8xf32>
    %c0_83 = arith.constant 0 : index
    %c0_84 = arith.constant 0 : index
    %c24_85 = arith.constant 24 : index
    %73 = vector.load %arg17[%c0_83, %c0_84, %c24_85] : memref<2x8x32xf32, #tpu.memory_space<vmem>>, vector<2x8x8xf32>
    "tpu.trace_start"() <{level = 10 : i32, message = "bld,bsd->bls"}> : () -> ()
    %cst_86 = arith.constant dense<0.000000e+00> : vector<2x8x8xf32>
    %74 = tpu.matmul %71, %72, %cst_86 {dimension_numbers = #tpu.dot_dimension_numbers<[2], [2], [1], [1], [0, 0, 0, 1, 1, 1], [0], [0]>} : vector<2x8x8xf32>, vector<2x8x8xf32>, vector<2x8x8xf32> -> vector<2x8x8xf32>
    "tpu.trace_stop"() : () -> ()
    %cst_87 = arith.constant dense<0xFF800000> : vector<2x8xf32>
    %75 = vector.multi_reduction <maximumf>, %74, %cst_87 [2] : vector<2x8x8xf32> to vector<2x8xf32>
    %76 = vector.shape_cast %75 : vector<2x8xf32> to vector<2x8x1xf32>
    %77 = vector.broadcast %76 : vector<2x8x1xf32> to vector<2x8x8xf32>
    %78 = arith.subf %74, %77 : vector<2x8x8xf32>
    %79 = math.exp %78 : vector<2x8x8xf32>
    %cst_88 = arith.constant dense<0.000000e+00> : vector<2x8xf32>
    %80 = vector.multi_reduction <add>, %79, %cst_88 [2] : vector<2x8x8xf32> to vector<2x8xf32>
    %81 = vector.shape_cast %80 : vector<2x8xf32> to vector<2x8x1xf32>
    %82 = tpu.reciprocal %81 {approx = true} : vector<2x8x1xf32> -> vector<2x8x1xf32>
    %83 = vector.broadcast %82 : vector<2x8x1xf32> to vector<2x8x8xf32>
    %84 = arith.mulf %79, %83 : vector<2x8x8xf32>
    %c0_89 = arith.constant 0 : index
    %c0_90 = arith.constant 0 : index
    %c0_91 = arith.constant 0 : index
    %85 = vector.load %arg19[%c0_89, %c0_90, %c0_91] : memref<2x8x8xf32, #tpu.memory_space<vmem>>, vector<2x8x8xf32>
    %86 = arith.addf %85, %84 : vector<2x8x8xf32>
    %c0_92 = arith.constant 0 : index
    %c0_93 = arith.constant 0 : index
    %c0_94 = arith.constant 0 : index
    %87 = vector.load %arg19[%c0_92, %c0_93, %c0_94] : memref<2x8x8xf32, #tpu.memory_space<vmem>>, vector<2x8x8xf32>
    tpu.vector_store %arg19[%c0_92, %c0_93, %c0_94], %86 {strides = array<i32>} : memref<2x8x8xf32, #tpu.memory_space<vmem>>, vector<2x8x8xf32>,
    "tpu.trace_start"() <{level = 10 : i32, message = "bls,bsd->bld"}> : () -> ()
    %cst_95 = arith.constant dense<0.000000e+00> : vector<2x8x8xf32>
    %88 = tpu.matmul %84, %73, %cst_95 {dimension_numbers = #tpu.dot_dimension_numbers<[2], [1], [1], [2], [0, 0, 0, 1, 1, 2], [0], [0]>} : vector<2x8x8xf32>, vector<2x8x8xf32>, vector<2x8x8xf32> -> vector<2x8x8xf32>
    "tpu.trace_stop"() : () -> ()
    %c0_96 = arith.constant 0 : index
    %c0_97 = arith.constant 0 : index
    %c24_98 = arith.constant 24 : index
    %89 = vector.load %arg18[%c0_96, %c0_97, %c24_98] : memref<2x8x32xf32, #tpu.memory_space<vmem>>, vector<2x8x8xf32>
    tpu.vector_store %arg18[%c0_96, %c0_97, %c24_98], %88 {strides = array<i32>} : memref<2x8x32xf32, #tpu.memory_space<vmem>>, vector<2x8x8xf32>,
    %c0_99 = arith.constant 0 : index
    %c0_100 = arith.constant 0 : index
    %c0_101 = arith.constant 0 : index
    %90 = vector.load %arg18[%c0_99, %c0_100, %c0_101] : memref<2x8x32xf32, #tpu.memory_space<vmem>>, vector<2x8x32xf32>
    %91 = vector.shape_cast %90 : vector<2x8x32xf32> to vector<16x32xf32>
    %c0_102 = arith.constant 0 : index
    %c0_103 = arith.constant 0 : index
    %92 = vector.load %arg11[%c0_102, %c0_103] : memref<32x32xf32, #tpu.memory_space<vmem>>, vector<32x32xf32>
    %cst_104 = arith.constant dense<0.000000e+00> : vector<16x32xf32>
    %93 = tpu.matmul %91, %92, %cst_104 {dimension_numbers = #tpu.dot_dimension_numbers<[1], [0], [0], [1], [0, 0, 1, 1], [], []>} : vector<16x32xf32>, vector<32x32xf32>, vector<16x32xf32> -> vector<16x32xf32>
    %c0_105 = arith.constant 0 : index
    %c0_106 = arith.constant 0 : index
    %94 = vector.load %arg12[%c0_105, %c0_106] : memref<1x32xf32, #tpu.memory_space<vmem>>, vector<1x32xf32>
    %95 = vector.broadcast %94 : vector<1x32xf32> to vector<16x32xf32>
    %96 = arith.addf %93, %95 : vector<16x32xf32>
    %97 = vector.shape_cast %96 : vector<16x32xf32> to vector<2x8x32xf32>
    %c0_107 = arith.constant 0 : index
    %c0_108 = arith.constant 0 : index
    %c0_109 = arith.constant 0 : index
    %98 = vector.load %arg13[%c0_107, %c0_108, %c0_109] : memref<2x8x32xf32, #tpu.memory_space<vmem>>, vector<2x8x32xf32>
    tpu.vector_store %arg13[%c0_107, %c0_108, %c0_109], %97 {strides = array<i32>} : memref<2x8x32xf32, #tpu.memory_space<vmem>>, vector<2x8x32xf32>,
    %c0_110 = arith.constant 0 : index
    %c0_111 = arith.constant 0 : index
    %c0_112 = arith.constant 0 : index
    %99 = vector.load %arg19[%c0_110, %c0_111, %c0_112] : memref<2x8x8xf32, #tpu.memory_space<vmem>>, vector<2x8x8xf32>
    %cst_113 = arith.constant 2.500000e-01 : f32
    %100 = vector.broadcast %cst_113 : f32 to vector<2x8x8xf32>
    %101 = arith.mulf %99, %100 : vector<2x8x8xf32>
    %c0_114 = arith.constant 0 : index
    %c0_115 = arith.constant 0 : index
    %c0_116 = arith.constant 0 : index
    %102 = vector.load %arg14[%c0_114, %c0_115, %c0_116] : memref<2x8x8xf32, #tpu.memory_space<vmem>>, vector<2x8x8xf32>
    tpu.vector_store %arg14[%c0_114, %c0_115, %c0_116], %101 {strides = array<i32>} : memref<2x8x8xf32, #tpu.memory_space<vmem>>, vector<2x8x8xf32>,
    return
  }
  func.func @transform_0(%arg0: i32, %arg1: i32) -> (i32, i32, i32) {
    %c0_i32 = arith.constant 0 : i32
    %c0_i32_0 = arith.constant 0 : i32
    return %arg0, %arg1, %c0_i32 : i32, i32, i32
  }
  func.func @transform_1(%arg0: i32, %arg1: i32) -> (i32, i32, i32) {
    %c0_i32 = arith.constant 0 : i32
    %c0_i32_0 = arith.constant 0 : i32
    %c0_i32_1 = arith.constant 0 : i32
    return %arg0, %c0_i32, %c0_i32_0 : i32, i32, i32
  }
  func.func @transform_2(%arg0: i32, %arg1: i32) -> (i32, i32, i32) {
    %c0_i32 = arith.constant 0 : i32
    %c0_i32_0 = arith.constant 0 : i32
    %c0_i32_1 = arith.constant 0 : i32
    return %arg0, %c0_i32, %c0_i32_0 : i32, i32, i32
  }
  func.func @transform_3(%arg0: i32, %arg1: i32) -> (i32, i32) {
    %c0_i32 = arith.constant 0 : i32
    %c0_i32_0 = arith.constant 0 : i32
    %c0_i32_1 = arith.constant 0 : i32
    return %c0_i32, %c0_i32_0 : i32, i32
  }
  func.func @transform_4(%arg0: i32, %arg1: i32) -> (i32, i32) {
    %c0_i32 = arith.constant 0 : i32
    %c0_i32_0 = arith.constant 0 : i32
    %c0_i32_1 = arith.constant 0 : i32
    return %c0_i32, %c0_i32_0 : i32, i32
  }
  func.func @transform_5(%arg0: i32, %arg1: i32) -> (i32, i32) {
    %c0_i32 = arith.constant 0 : i32
    %c0_i32_0 = arith.constant 0 : i32
    %c0_i32_1 = arith.constant 0 : i32
    return %c0_i32, %c0_i32_0 : i32, i32
  }
  func.func @transform_6(%arg0: i32, %arg1: i32) -> (i32, i32) {
    %c0_i32 = arith.constant 0 : i32
    %c0_i32_0 = arith.constant 0 : i32
    %c0_i32_1 = arith.constant 0 : i32
    return %c0_i32, %c0_i32_0 : i32, i32
  }
  func.func @transform_7(%arg0: i32, %arg1: i32) -> (i32, i32) {
    %c0_i32 = arith.constant 0 : i32
    %c0_i32_0 = arith.constant 0 : i32
    %c0_i32_1 = arith.constant 0 : i32
    return %c0_i32, %c0_i32_0 : i32, i32
  }
  func.func @transform_8(%arg0: i32, %arg1: i32) -> (i32, i32) {
    %c0_i32 = arith.constant 0 : i32
    %c0_i32_0 = arith.constant 0 : i32
    %c0_i32_1 = arith.constant 0 : i32
    return %c0_i32, %c0_i32_0 : i32, i32
  }
  func.func @transform_9(%arg0: i32, %arg1: i32) -> (i32, i32) {
    %c0_i32 = arith.constant 0 : i32
    %c0_i32_0 = arith.constant 0 : i32
    %c0_i32_1 = arith.constant 0 : i32
    return %c0_i32, %c0_i32_0 : i32, i32
  }
  func.func @transform_10(%arg0: i32, %arg1: i32) -> (i32, i32) {
    %c0_i32 = arith.constant 0 : i32
    %c0_i32_0 = arith.constant 0 : i32
    %c0_i32_1 = arith.constant 0 : i32
    return %c0_i32, %c0_i32_0 : i32, i32
  }
  func.func @transform_11(%arg0: i32, %arg1: i32) -> (i32, i32, i32) {
    %c0_i32 = arith.constant 0 : i32
    %c0_i32_0 = arith.constant 0 : i32
    return %arg0, %arg1, %c0_i32 : i32, i32, i32
  }
  func.func @transform_12(%arg0: i32, %arg1: i32) -> (i32, i32, i32) {
    %c0_i32 = arith.constant 0 : i32
    %c0_i32_0 = arith.constant 0 : i32
    return %arg0, %arg1, %c0_i32 : i32, i32, i32
  }
}

</mosaic_0001>

<llo_original>
// kernel: tpu_custom_call.1
$region0: #{tpu_custom_call.1}
  #allocation0 [shape = 'u32[]', space=smem, size = 0x4, offset = 0x4, fixed_abs, tag = 'smem constant byte address 0x4 - core index']
  #allocation1 [shape = 'u32[144,128]{1,0:T(1,128)}', space=vmem, size = 0x12000, scoped, tag = 'internal scratch']
  #allocation2 [shape = 'f32[2,8,32]{2,1,0:T(8,128)}', space=vmem, size = 0x2000, scoped, tag = 'scratch operand']
  #allocation3 [shape = 'f32[2,8,32]{2,1,0:T(8,128)}', space=vmem, size = 0x2000, scoped, tag = 'scratch operand']
  #allocation4 [shape = 'f32[2,8,32]{2,1,0:T(8,128)}', space=vmem, size = 0x2000, scoped, tag = 'scratch operand']
  #allocation5 [shape = 'f32[2,8,32]{2,1,0:T(8,128)}', space=vmem, size = 0x2000, scoped, tag = 'scratch operand']
  #allocation6 [shape = 'f32[2,8,8]{2,1,0:T(8,128)}', space=vmem, size = 0x2000, scoped, tag = 'scratch operand']
  %s0 = inlined_call_operand.hbm [shape: f32[2,8,32], index: 0, kind: input, shape index: {}]
  %s1 = inlined_call_operand.hbm [shape: f32[2,8,32], index: 1, kind: input, shape index: {}]
  %s2 = inlined_call_operand.hbm [shape: f32[2,8,32], index: 2, kind: input, shape index: {}]
  %s3 = inlined_call_operand.hbm [shape: f32[32,32], index: 3, kind: input, shape index: {}]
  %s4 = inlined_call_operand.hbm [shape: f32[32,32], index: 4, kind: input, shape index: {}]
  %s5 = inlined_call_operand.hbm [shape: f32[32,32], index: 5, kind: input, shape index: {}]
  %s6 = inlined_call_operand.vmem [shape: f32[1,32], index: 6, kind: input, shape index: {}]
  %s7 = inlined_call_operand.vmem [shape: f32[1,32], index: 7, kind: input, shape index: {}]
  %s8 = inlined_call_operand.hbm [shape: f32[1,32], index: 8, kind: input, shape index: {}]
  %s9 = inlined_call_operand.vmem [shape: f32[32,32], index: 9, kind: input, shape index: {}]
  %s10 = inlined_call_operand.vmem [shape: f32[1,32], index: 10, kind: input, shape index: {}]
  %s11 = inlined_call_operand.hbm [shape: f32[2,8,32], index: 11, kind: output, shape index: {0}]
  %s12 = inlined_call_operand.hbm [shape: f32[2,8,8], index: 12, kind: output, shape index: {1}]
  %13 = xla_tuple %s11, %s12
  %s14 = sld [smem:[#allocation0]]
  $region94: #{tpu_custom_call.1} parent=0
    _
  %s16 = ssub.s32 1, %s14
  %s17 = scalar_select 0, %s16, %s14
  $region1: #{tpu_custom_call.1} parent=0
    #allocation7 [shape = 'u8[8192]{0}', space=vmem, size = 0x2000, scoped, tag = 'input window, operand 0, single buffered']
    #allocation8 [shape = 's32[1]{0}', space=sflag, size = 0x4, scoped, tag = 'scoped memory for tpu_custom_call.1']
    #allocation9 [shape = 's32[1]{0}', space=sflag, size = 0x4, scoped, tag = 'scoped memory for tpu_custom_call.1']
    #allocation10 [shape = 'u8[8192]{0}', space=vmem, size = 0x2000, scoped, tag = 'input window, operand 1, single buffered']
    #allocation11 [shape = 's32[1]{0}', space=sflag, size = 0x4, scoped, tag = 'scoped memory for tpu_custom_call.1']
    #allocation12 [shape = 'u8[8192]{0}', space=vmem, size = 0x2000, scoped, tag = 'input window, operand 2, single buffered']
    #allocation13 [shape = 'u8[16384]{0}', space=vmem, size = 0x4000, scoped, tag = 'input window, operand 3, single buffered']
    #allocation14 [shape = 's32[1]{0}', space=sflag, size = 0x4, scoped, tag = 'scoped memory for tpu_custom_call.1']
    #allocation15 [shape = 'u8[16384]{0}', space=vmem, size = 0x4000, scoped, tag = 'input window, operand 4, single buffered']
    #allocation16 [shape = 'u8[16384]{0}', space=vmem, size = 0x4000, scoped, tag = 'input window, operand 5, single buffered']
    #allocation17 [shape = 's32[1]{0}', space=sflag, size = 0x4, scoped, tag = 'scoped memory for tpu_custom_call.1']
    #allocation18 [shape = 'u8[512]{0}', space=vmem, size = 0x400, scoped, tag = 'input window, operand 8, single buffered']
    #allocation19 [shape = 'u8[8192]{0}', space=vmem, size = 0x2000, scoped, tag = 'output window, operand 0, single buffered']
    #allocation20 [shape = 'u8[8192]{0}', space=vmem, size = 0x2000, scoped, tag = 'output window, operand 1, single buffered']
    #allocation21 [shape = 's32[1]{0}', space=sflag, size = 0x4, scoped, tag = 'scoped memory for tpu_custom_call.1']
    %18 = vsyncpa [#allocation8], 0
    %19 = vsyncpa [#allocation11], 0
    %20 = vsyncpa [#allocation14], 0
    %21 = vsyncpa [#allocation17], 0
    %22 = vsyncpa [#allocation9], 0
    %23 = vsyncpa [#allocation21], 0
    // Predicated region
    $region2: #{tpu_custom_call.1} parent=1 // pred_check
      _
    $region3: #{tpu_custom_call.1} parent=1 // pred_check_branch
      %25 = sbr.rel (0) target = $region5
    $region4: #{tpu_custom_call.1} parent=1 // pred_region
      %s27 = ssub.s32 256, 256
      %28 = vsyncadd [#allocation8], %s27
      %s29 = sshll.u32 [#allocation7], 4
      %s30 = int_to_ptr.vmem [resolvable:$true] %s29
      %35 = dma.hbm_to_vmem [thread:$0]  %s0, 256, %s30, [#allocation8], 128, 128, 8
    $region5: #{tpu_custom_call.1} parent=1 // pred_fallthru
      _
    // Predicated region
    $region6: #{tpu_custom_call.1} parent=1 // pred_check
      _
    $region7: #{tpu_custom_call.1} parent=1 // pred_check_branch
      %37 = sbr.rel (0) target = $region9
    $region8: #{tpu_custom_call.1} parent=1 // pred_region
      %s39 = ssub.s32 256, 256
      %40 = vsyncadd [#allocation11], %s39
      %s41 = sshll.u32 [#allocation10], 4
      %s42 = int_to_ptr.vmem [resolvable:$true] %s41
      %47 = dma.hbm_to_vmem [thread:$0]  %s1, 256, %s42, [#allocation11], 128, 128, 8
    $region9: #{tpu_custom_call.1} parent=1 // pred_fallthru
      _
    // Predicated region
    $region10: #{tpu_custom_call.1} parent=1 // pred_check
      _
    $region11: #{tpu_custom_call.1} parent=1 // pred_check_branch
      %49 = sbr.rel (0) target = $region13
    $region12: #{tpu_custom_call.1} parent=1 // pred_region
      %s51 = ssub.s32 256, 256
      %52 = vsyncadd [#allocation11], %s51
      %s53 = sshll.u32 [#allocation12], 4
      %s54 = int_to_ptr.vmem [resolvable:$true] %s53
      %59 = dma.hbm_to_vmem [thread:$0]  %s2, 256, %s54, [#allocation11], 128, 128, 8
    $region13: #{tpu_custom_call.1} parent=1 // pred_fallthru
      _
    // Predicated region
    $region14: #{tpu_custom_call.1} parent=1 // pred_check
      _
    $region15: #{tpu_custom_call.1} parent=1 // pred_check_branch
      %61 = sbr.rel (0) target = $region17
    $region16: #{tpu_custom_call.1} parent=1 // pred_region
      %s63 = ssub.s32 512, 512
      %64 = vsyncadd [#allocation14], %s63
      %s65 = sshll.u32 [#allocation13], 4
      %s66 = int_to_ptr.vmem [resolvable:$true] %s65
      %71 = dma.hbm_to_vmem [thread:$0]  %s3, 512, %s66, [#allocation14], 128, 128, 8
    $region17: #{tpu_custom_call.1} parent=1 // pred_fallthru
      _
    // Predicated region
    $region18: #{tpu_custom_call.1} parent=1 // pred_check
      _
    $region19: #{tpu_custom_call.1} parent=1 // pred_check_branch
      %73 = sbr.rel (0) target = $region21
    $region20: #{tpu_custom_call.1} parent=1 // pred_region
      %s75 = ssub.s32 512, 512
      %76 = vsyncadd [#allocation14], %s75
      %s77 = sshll.u32 [#allocation15], 4
      %s78 = int_to_ptr.vmem [resolvable:$true] %s77
      %83 = dma.hbm_to_vmem [thread:$0]  %s4, 512, %s78, [#allocation14], 128, 128, 8
    $region21: #{tpu_custom_call.1} parent=1 // pred_fallthru
      _
    // Predicated region
    $region22: #{tpu_custom_call.1} parent=1 // pred_check
      _
    $region23: #{tpu_custom_call.1} parent=1 // pred_check_branch
      %85 = sbr.rel (0) target = $region25
    $region24: #{tpu_custom_call.1} parent=1 // pred_region
      %s87 = ssub.s32 512, 512
      %88 = vsyncadd [#allocation17], %s87
      %s89 = sshll.u32 [#allocation16], 4
      %s90 = int_to_ptr.vmem [resolvable:$true] %s89
      %95 = dma.hbm_to_vmem [thread:$0]  %s5, 512, %s90, [#allocation17], 128, 128, 8
    $region25: #{tpu_custom_call.1} parent=1 // pred_fallthru
      _
    // Predicated region
    $region26: #{tpu_custom_call.1} parent=1 // pred_check
      _
    $region27: #{tpu_custom_call.1} parent=1 // pred_check_branch
      %97 = sbr.rel (0) target = $region29
    $region28: #{tpu_custom_call.1} parent=1 // pred_region
      _
    $region29: #{tpu_custom_call.1} parent=1 // pred_fallthru
      _
    // Predicated region
    $region30: #{tpu_custom_call.1} parent=1 // pred_check
      _
    $region31: #{tpu_custom_call.1} parent=1 // pred_check_branch
      %99 = sbr.rel (0) target = $region33
    $region32: #{tpu_custom_call.1} parent=1 // pred_region
      _
    $region33: #{tpu_custom_call.1} parent=1 // pred_fallthru
      _
    // Predicated region
    $region34: #{tpu_custom_call.1} parent=1 // pred_check
      _
    $region35: #{tpu_custom_call.1} parent=1 // pred_check_branch
      %101 = sbr.rel (0) target = $region37
    $region36: #{tpu_custom_call.1} parent=1 // pred_region
      %s103 = ssub.s32 16, 16
      %104 = vsyncadd [#allocation17], %s103
      %s106 = sshll.u32 [#allocation18], 4
      %s107 = int_to_ptr.vmem [resolvable:$true] %s106
      %109 = dma.hbm_to_vmem [thread:$0]  %s8, 16, %s107, [#allocation17]
    $region37: #{tpu_custom_call.1} parent=1 // pred_fallthru
      _
    // Predicated region
    $region38: #{tpu_custom_call.1} parent=1 // pred_check
      _
    $region39: #{tpu_custom_call.1} parent=1 // pred_check_branch
      %111 = sbr.rel (0) target = $region41
    $region40: #{tpu_custom_call.1} parent=1 // pred_region
      _
    $region41: #{tpu_custom_call.1} parent=1 // pred_fallthru
      _
    // Predicated region
    $region42: #{tpu_custom_call.1} parent=1 // pred_check
      _
    $region43: #{tpu_custom_call.1} parent=1 // pred_check_branch
      %113 = sbr.rel (0) target = $region45
    $region44: #{tpu_custom_call.1} parent=1 // pred_region
      _
    $region45: #{tpu_custom_call.1} parent=1 // pred_fallthru
      _
    // Predicated region
    $region46: #{tpu_custom_call.1} parent=1 // pred_check
      _
    $region47: #{tpu_custom_call.1} parent=1 // pred_check_branch
      %115 = sbr.rel (0) target = $region49
    $region48: #{tpu_custom_call.1} parent=1 // pred_region
      %116 = dma.done [#allocation8], 256
    $region49: #{tpu_custom_call.1} parent=1 // pred_fallthru
      _
    // Predicated region
    $region50: #{tpu_custom_call.1} parent=1 // pred_check
      _
    $region51: #{tpu_custom_call.1} parent=1 // pred_check_branch
      %118 = sbr.rel (0) target = $region53
    $region52: #{tpu_custom_call.1} parent=1 // pred_region
      %119 = dma.done [#allocation11], 256
    $region53: #{tpu_custom_call.1} parent=1 // pred_fallthru
      _
    // Predicated region
    $region54: #{tpu_custom_call.1} parent=1 // pred_check
      _
    $region55: #{tpu_custom_call.1} parent=1 // pred_check_branch
      %121 = sbr.rel (0) target = $region57
    $region56: #{tpu_custom_call.1} parent=1 // pred_region
      %122 = dma.done [#allocation11], 256
    $region57: #{tpu_custom_call.1} parent=1 // pred_fallthru
      _
    // Predicated region
    $region58: #{tpu_custom_call.1} parent=1 // pred_check
      _
    $region59: #{tpu_custom_call.1} parent=1 // pred_check_branch
      %124 = sbr.rel (0) target = $region61
    $region60: #{tpu_custom_call.1} parent=1 // pred_region
      %125 = dma.done [#allocation14], 512
    $region61: #{tpu_custom_call.1} parent=1 // pred_fallthru
      _
    // Predicated region
    $region62: #{tpu_custom_call.1} parent=1 // pred_check
      _
    $region63: #{tpu_custom_call.1} parent=1 // pred_check_branch
      %127 = sbr.rel (0) target = $region65
    $region64: #{tpu_custom_call.1} parent=1 // pred_region
      %128 = dma.done [#allocation14], 512
    $region65: #{tpu_custom_call.1} parent=1 // pred_fallthru
      _
    // Predicated region
    $region66: #{tpu_custom_call.1} parent=1 // pred_check
      _
    $region67: #{tpu_custom_call.1} parent=1 // pred_check_branch
      %130 = sbr.rel (0) target = $region69
    $region68: #{tpu_custom_call.1} parent=1 // pred_region
      %131 = dma.done [#allocation17], 512
    $region69: #{tpu_custom_call.1} parent=1 // pred_fallthru
      _
    // Predicated region
    $region70: #{tpu_custom_call.1} parent=1 // pred_check
      _
    $region71: #{tpu_custom_call.1} parent=1 // pred_check_branch
      %133 = sbr.rel (0) target = $region73
    $region72: #{tpu_custom_call.1} parent=1 // pred_region
      %134 = dma.done [#allocation17], 16
    $region73: #{tpu_custom_call.1} parent=1 // pred_fallthru
      _
    %p135 = scmp.eq.s32.totalorder 0, 0
    // Predicated region
    $region74: #{tpu_custom_call.1} parent=1 // pred_check
      %p136 = pneg %p135
    $region75: #{tpu_custom_call.1} parent=1 // pred_check_branch
      %138 = sbr.rel (%p136) target = $region77
    $region76: #{tpu_custom_call.1} parent=1 // pred_region
      %v139 = vld [vmem:[#allocation10] sm:$0xff]
      %v140 = vld [vmem:[#allocation10 + $0x8] sm:$0xff]
      %v141 = vld [vmem:[#allocation12] sm:$0xff]
      %v142 = vld [vmem:[#allocation12 + $0x8] sm:$0xff]
      %v143 = vld [vmem:[#allocation15] sm:$0xff]
      %v144 = vld [vmem:[#allocation15 + $0x8] sm:$0xff]
      %v145 = vld [vmem:[#allocation15 + $0x10] sm:$0xff]
      %v146 = vld [vmem:[#allocation15 + $0x18] sm:$0xff]
      %v147 = vld [vmem:[%s7] sm:$0x1]
      %v149 = vlaneseq
      %v150 = vshrl.u32 %v149, 7
      %v151 = vsub.s32 0, %v150
      %v152 = vrot.slane %v147, %v151
      %vm154 = vcmask 261120
      %v156 = vsel %vm154, %v139, 0
      %v159 = vsel %vm154, %v140, 0
      %161 = vmatprep.subr.mxu0 0.0
      %162 = vmatpush1.msra.mxu0 %v143
      %163 = vmatprep.subr.mxu0 0.0
      %164 = vmatpush1.msra.mxu0 %v144
      %165 = vmatprep.subr.mxu0 0.0
      %166 = vmatpush1.msra.mxu0 %v145
      %167 = vmatprep.subr.mxu0 0.0
      %168 = vmatpush1.msra.mxu0 %v146
      %169 = vmatprep.subr.mxu0 0.0
      %170 = vmatpush1.msra.mxu0 0.0
      %171 = vmatprep.subr.mxu0 0.0
      %172 = vmatpush1.msra.mxu0 0.0
      %173 = vmatprep.subr.mxu0 0.0
      %174 = vmatpush1.msra.mxu0 0.0
      %175 = vmatprep.subr.mxu0 0.0
      %176 = vmatpush1.msra.mxu0 0.0
      %177 = vmatprep.subr.mxu0 0.0
      %178 = vmatpush1.msra.mxu0 0.0
      %179 = vmatprep.subr.mxu0 0.0
      %180 = vmatpush1.msra.mxu0 0.0
      %181 = vmatprep.subr.mxu0 0.0
      %182 = vmatpush1.msra.mxu0 0.0
      %183 = vmatprep.subr.mxu0 0.0
      %184 = vmatpush1.msra.mxu0 0.0
      %185 = vmatprep.subr.mxu0 0.0
      %186 = vmatpush1.msra.mxu0 0.0
      %187 = vmatprep.subr.mxu0 0.0
      %188 = vmatpush1.msra.mxu0 0.0
      %189 = vmatprep.subr.mxu0 0.0
      %190 = vmatpush1.msra.mxu0 0.0
      %191 = vmatprep.subr.mxu0 0.0
      %192 = vmatpush1.msra.mxu0 0.0
      %193 = vmatprep.subr.mxu0 0.0
      %194 = vmatpush1.msra.mxu0 0.0
      %195 = vmatprep.subr.mxu0 0.0
      %196 = vmatpush1.msra.mxu0 0.0
      %197 = vmatprep.subr.mxu0 0.0
      %198 = vmatpush1.msra.mxu0 0.0
      %199 = vmatprep.subr.mxu0 0.0
      %200 = vmatpush1.msra.mxu0 0.0
      %201 = vmatprep.subr.mxu0 0.0
      %202 = vmatpush1.msra.mxu0 0.0
      %203 = vmatprep.subr.mxu0 0.0
      %204 = vmatpush1.msra.mxu0 0.0
      %205 = vmatprep.subr.mxu0 0.0
      %206 = vmatpush1.msra.mxu0 0.0
      %207 = vmatprep.subr.mxu0 0.0
      %208 = vmatpush1.msra.mxu0 0.0
      %209 = vmatprep.subr.mxu0 0.0
      %210 = vmatpush1.msra.mxu0 0.0
      %211 = vmatprep.subr.mxu0 0.0
      %212 = vmatpush1.msra.mxu0 0.0
      %213 = vmatprep.subr.mxu0 0.0
      %214 = vmatpush1.msra.mxu0 0.0
      %215 = vmatprep.subr.mxu0 0.0
      %216 = vmatpush1.msra.mxu0 0.0
      %217 = vmatprep.subr.mxu0 0.0
      %218 = vmatpush1.msra.mxu0 0.0
      %219 = vmatprep.subr.mxu0 0.0
      %220 = vmatpush1.msra.mxu0 0.0
      %221 = vmatprep.subr.mxu0 0.0
      %222 = vmatpush1.msra.mxu0 0.0
      %223 = vmatprep.subr.mxu0 0.0
      %224 = vmatpush1.msra.mxu0 0.0
      %225 = vmatprep.mubr.f32.mxu0 0.0
      %226 = vmatmul.mubr.f32.gmra.mrb[0].mxu0 %v156
      %v227 = vpop.f32.mrb[0].mxu0
      %v228 = vadd.f32 %v152, %v227
      %v229 = vpop.f32.mrb[0].mxu0
      %230 = vmatprep.mubr.f32.mxu0 0.0
      %231 = vmatmul.mubr.f32.gmra.mrb[0].mxu0 %v159
      %v232 = vpop.f32.mrb[0].mxu0
      %v233 = vadd.f32 %v152, %v232
      %v234 = vpop.f32.mrb[0].mxu0
      %235 = vdwg.mxu0
      %236 = vst.msk [vmem:[#allocation3] sm:$0xff] %vm154, %v228
      %237 = vst.msk [vmem:[#allocation3 + $0x8] sm:$0xff] %vm154, %v233
      %v238 = vld [vmem:[#allocation16] sm:$0xff]
      %v239 = vld [vmem:[#allocation16 + $0x8] sm:$0xff]
      %v240 = vld [vmem:[#allocation16 + $0x10] sm:$0xff]
      %v241 = vld [vmem:[#allocation16 + $0x18] sm:$0xff]
      %v242 = vld [vmem:[#allocation18] sm:$0x1]
      %v244 = vlaneseq
      %v245 = vshrl.u32 %v244, 7
      %v246 = vsub.s32 0, %v245
      %v247 = vrot.slane %v242, %v246
      %v250 = vsel %vm154, %v141, 0
      %v253 = vsel %vm154, %v142, 0
      %255 = vmatprep.subr.mxu0 0.0
      %256 = vmatpush1.msra.mxu0 %v238
      %257 = vmatprep.subr.mxu0 0.0
      %258 = vmatpush1.msra.mxu0 %v239
      %259 = vmatprep.subr.mxu0 0.0
      %260 = vmatpush1.msra.mxu0 %v240
      %261 = vmatprep.subr.mxu0 0.0
      %262 = vmatpush1.msra.mxu0 %v241
      %263 = vmatprep.subr.mxu0 0.0
      %264 = vmatpush1.msra.mxu0 0.0
      %265 = vmatprep.subr.mxu0 0.0
      %266 = vmatpush1.msra.mxu0 0.0
      %267 = vmatprep.subr.mxu0 0.0
      %268 = vmatpush1.msra.mxu0 0.0
      %269 = vmatprep.subr.mxu0 0.0
      %270 = vmatpush1.msra.mxu0 0.0
      %271 = vmatprep.subr.mxu0 0.0
      %272 = vmatpush1.msra.mxu0 0.0
      %273 = vmatprep.subr.mxu0 0.0
      %274 = vmatpush1.msra.mxu0 0.0
      %275 = vmatprep.subr.mxu0 0.0
      %276 = vmatpush1.msra.mxu0 0.0
      %277 = vmatprep.subr.mxu0 0.0
      %278 = vmatpush1.msra.mxu0 0.0
      %279 = vmatprep.subr.mxu0 0.0
      %280 = vmatpush1.msra.mxu0 0.0
      %281 = vmatprep.subr.mxu0 0.0
      %282 = vmatpush1.msra.mxu0 0.0
      %283 = vmatprep.subr.mxu0 0.0
      %284 = vmatpush1.msra.mxu0 0.0
      %285 = vmatprep.subr.mxu0 0.0
      %286 = vmatpush1.msra.mxu0 0.0
      %287 = vmatprep.subr.mxu0 0.0
      %288 = vmatpush1.msra.mxu0 0.0
      %289 = vmatprep.subr.mxu0 0.0
      %290 = vmatpush1.msra.mxu0 0.0
      %291 = vmatprep.subr.mxu0 0.0
      %292 = vmatpush1.msra.mxu0 0.0
      %293 = vmatprep.subr.mxu0 0.0
      %294 = vmatpush1.msra.mxu0 0.0
      %295 = vmatprep.subr.mxu0 0.0
      %296 = vmatpush1.msra.mxu0 0.0
      %297 = vmatprep.subr.mxu0 0.0
      %298 = vmatpush1.msra.mxu0 0.0
      %299 = vmatprep.subr.mxu0 0.0
      %300 = vmatpush1.msra.mxu0 0.0
      %301 = vmatprep.subr.mxu0 0.0
      %302 = vmatpush1.msra.mxu0 0.0
      %303 = vmatprep.subr.mxu0 0.0
      %304 = vmatpush1.msra.mxu0 0.0
      %305 = vmatprep.subr.mxu0 0.0
      %306 = vmatpush1.msra.mxu0 0.0
      %307 = vmatprep.subr.mxu0 0.0
      %308 = vmatpush1.msra.mxu0 0.0
      %309 = vmatprep.subr.mxu0 0.0
      %310 = vmatpush1.msra.mxu0 0.0
      %311 = vmatprep.subr.mxu0 0.0
      %312 = vmatpush1.msra.mxu0 0.0
      %313 = vmatprep.subr.mxu0 0.0
      %314 = vmatpush1.msra.mxu0 0.0
      %315 = vmatprep.subr.mxu0 0.0
      %316 = vmatpush1.msra.mxu0 0.0
      %317 = vmatprep.subr.mxu0 0.0
      %318 = vmatpush1.msra.mxu0 0.0
      %319 = vmatprep.mubr.f32.mxu0 0.0
      %320 = vmatmul.mubr.f32.gmra.mrb[0].mxu0 %v250
      %v321 = vpop.f32.mrb[0].mxu0
      %v322 = vadd.f32 %v247, %v321
      %v323 = vpop.f32.mrb[0].mxu0
      %324 = vmatprep.mubr.f32.mxu0 0.0
      %325 = vmatmul.mubr.f32.gmra.mrb[0].mxu0 %v253
      %v326 = vpop.f32.mrb[0].mxu0
      %v327 = vadd.f32 %v247, %v326
      %v328 = vpop.f32.mrb[0].mxu0
      %329 = vdwg.mxu0
      %330 = vst.msk [vmem:[#allocation4] sm:$0xff] %vm154, %v322
      %331 = vst.msk [vmem:[#allocation4 + $0x8] sm:$0xff] %vm154, %v327
    $region77: #{tpu_custom_call.1} parent=1 // pred_fallthru
      _
    %v332 = vld [vmem:[#allocation7] sm:$0xff]
    %v333 = vld [vmem:[#allocation7 + $0x8] sm:$0xff]
    %v334 = vld [vmem:[#allocation13] sm:$0xff]
    %v335 = vld [vmem:[#allocation13 + $0x8] sm:$0xff]
    %v336 = vld [vmem:[#allocation13 + $0x10] sm:$0xff]
    %v337 = vld [vmem:[#allocation13 + $0x18] sm:$0xff]
    %v338 = vld [vmem:[%s6] sm:$0x1]
    %v340 = vlaneseq
    %v341 = vshrl.u32 %v340, 7
    %v342 = vsub.s32 0, %v341
    %v343 = vrot.slane %v338, %v342
    %vm345 = vcmask 261120
    %v347 = vsel %vm345, %v332, 0
    %v350 = vsel %vm345, %v333, 0
    %352 = vmatprep.subr.mxu0 0.0
    %353 = vmatpush1.msra.mxu0 %v334
    %354 = vmatprep.subr.mxu0 0.0
    %355 = vmatpush1.msra.mxu0 %v335
    %356 = vmatprep.subr.mxu0 0.0
    %357 = vmatpush1.msra.mxu0 %v336
    %358 = vmatprep.subr.mxu0 0.0
    %359 = vmatpush1.msra.mxu0 %v337
    %360 = vmatprep.subr.mxu0 0.0
    %361 = vmatpush1.msra.mxu0 0.0
    %362 = vmatprep.subr.mxu0 0.0
    %363 = vmatpush1.msra.mxu0 0.0
    %364 = vmatprep.subr.mxu0 0.0
    %365 = vmatpush1.msra.mxu0 0.0
    %366 = vmatprep.subr.mxu0 0.0
    %367 = vmatpush1.msra.mxu0 0.0
    %368 = vmatprep.subr.mxu0 0.0
    %369 = vmatpush1.msra.mxu0 0.0
    %370 = vmatprep.subr.mxu0 0.0
    %371 = vmatpush1.msra.mxu0 0.0
    %372 = vmatprep.subr.mxu0 0.0
    %373 = vmatpush1.msra.mxu0 0.0
    %374 = vmatprep.subr.mxu0 0.0
    %375 = vmatpush1.msra.mxu0 0.0
    %376 = vmatprep.subr.mxu0 0.0
    %377 = vmatpush1.msra.mxu0 0.0
    %378 = vmatprep.subr.mxu0 0.0
    %379 = vmatpush1.msra.mxu0 0.0
    %380 = vmatprep.subr.mxu0 0.0
    %381 = vmatpush1.msra.mxu0 0.0
    %382 = vmatprep.subr.mxu0 0.0
    %383 = vmatpush1.msra.mxu0 0.0
    %384 = vmatprep.subr.mxu0 0.0
    %385 = vmatpush1.msra.mxu0 0.0
    %386 = vmatprep.subr.mxu0 0.0
    %387 = vmatpush1.msra.mxu0 0.0
    %388 = vmatprep.subr.mxu0 0.0
    %389 = vmatpush1.msra.mxu0 0.0
    %390 = vmatprep.subr.mxu0 0.0
    %391 = vmatpush1.msra.mxu0 0.0
    %392 = vmatprep.subr.mxu0 0.0
    %393 = vmatpush1.msra.mxu0 0.0
    %394 = vmatprep.subr.mxu0 0.0
    %395 = vmatpush1.msra.mxu0 0.0
    %396 = vmatprep.subr.mxu0 0.0
    %397 = vmatpush1.msra.mxu0 0.0
    %398 = vmatprep.subr.mxu0 0.0
    %399 = vmatpush1.msra.mxu0 0.0
    %400 = vmatprep.subr.mxu0 0.0
    %401 = vmatpush1.msra.mxu0 0.0
    %402 = vmatprep.subr.mxu0 0.0
    %403 = vmatpush1.msra.mxu0 0.0
    %404 = vmatprep.subr.mxu0 0.0
    %405 = vmatpush1.msra.mxu0 0.0
    %406 = vmatprep.subr.mxu0 0.0
    %407 = vmatpush1.msra.mxu0 0.0
    %408 = vmatprep.subr.mxu0 0.0
    %409 = vmatpush1.msra.mxu0 0.0
    %410 = vmatprep.subr.mxu0 0.0
    %411 = vmatpush1.msra.mxu0 0.0
    %412 = vmatprep.subr.mxu0 0.0
    %413 = vmatpush1.msra.mxu0 0.0
    %414 = vmatprep.subr.mxu0 0.0
    %415 = vmatpush1.msra.mxu0 0.0
    %416 = vmatprep.mubr.f32.mxu0 0.0
    %417 = vmatmul.mubr.f32.gmra.mrb[0].mxu0 %v347
    %v418 = vpop.f32.mrb[0].mxu0
    %v419 = vadd.f32 %v343, %v418
    %v420 = vpop.f32.mrb[0].mxu0
    %421 = vmatprep.mubr.f32.mxu0 0.0
    %422 = vmatmul.mubr.f32.gmra.mrb[0].mxu0 %v350
    %v423 = vpop.f32.mrb[0].mxu0
    %v424 = vadd.f32 %v343, %v423
    %v425 = vpop.f32.mrb[0].mxu0
    %426 = vdwg.mxu0
    %427 = vst.msk [vmem:[#allocation2] sm:$0xff] %vm345, %v419
    %428 = vst.msk [vmem:[#allocation2 + $0x8] sm:$0xff] %vm345, %v424
    %vm429 = vcmask 64512
    %430 = vst.msk [vmem:[#allocation6] sm:$0xff] %vm429, 0.0
    %431 = vst.msk [vmem:[#allocation6 + $0x8] sm:$0xff] %vm429, 0.0
    %v432 = vld [vmem:[#allocation2] sm:$0xff]
    %v433 = vld [vmem:[#allocation2 + $0x8] sm:$0xff]
    %v434 = vld [vmem:[#allocation3] sm:$0xff]
    %v435 = vld [vmem:[#allocation3 + $0x8] sm:$0xff]
    %v436 = vld [vmem:[#allocation4] sm:$0xff]
    %v437 = vld [vmem:[#allocation4 + $0x8] sm:$0xff]
    %v439 = vsel %vm429, %v432, 0
    %v442 = vsel %vm429, %v434, 0
    %444 = vmatprep.subr.mxu0 0.0
    %445 = vmatpush1.xpose.msra.mxu0 %v442
    %446 = vmatprep.subr.mxu0 0.0
    %447 = vmatpush1.xpose.msra.mxu0 0.0
    %448 = vmatprep.subr.mxu0 0.0
    %449 = vmatpush1.xpose.msra.mxu0 0.0
    %450 = vmatprep.subr.mxu0 0.0
    %451 = vmatpush1.xpose.msra.mxu0 0.0
    %452 = vmatprep.subr.mxu0 0.0
    %453 = vmatpush1.xpose.msra.mxu0 0.0
    %454 = vmatprep.subr.mxu0 0.0
    %455 = vmatpush1.xpose.msra.mxu0 0.0
    %456 = vmatprep.subr.mxu0 0.0
    %457 = vmatpush1.xpose.msra.mxu0 0.0
    %458 = vmatprep.subr.mxu0 0.0
    %459 = vmatpush1.xpose.msra.mxu0 0.0
    %460 = vmatprep.subr.mxu0 0.0
    %461 = vmatpush1.xpose.msra.mxu0 0.0
    %462 = vmatprep.subr.mxu0 0.0
    %463 = vmatpush1.xpose.msra.mxu0 0.0
    %464 = vmatprep.subr.mxu0 0.0
    %465 = vmatpush1.xpose.msra.mxu0 0.0
    %466 = vmatprep.subr.mxu0 0.0
    %467 = vmatpush1.xpose.msra.mxu0 0.0
    %468 = vmatprep.subr.mxu0 0.0
    %469 = vmatpush1.xpose.msra.mxu0 0.0
    %470 = vmatprep.subr.mxu0 0.0
    %471 = vmatpush1.xpose.msra.mxu0 0.0
    %472 = vmatprep.subr.mxu0 0.0
    %473 = vmatpush1.xpose.msra.mxu0 0.0
    %474 = vmatprep.subr.mxu0 0.0
    %475 = vmatpush1.xpose.msra.mxu0 0.0
    %476 = vmatprep.subr.mxu0 0.0
    %477 = vmatpush1.xpose.msra.mxu0 0.0
    %478 = vmatprep.subr.mxu0 0.0
    %479 = vmatpush1.xpose.msra.mxu0 0.0
    %480 = vmatprep.subr.mxu0 0.0
    %481 = vmatpush1.xpose.msra.mxu0 0.0
    %482 = vmatprep.subr.mxu0 0.0
    %483 = vmatpush1.xpose.msra.mxu0 0.0
    %484 = vmatprep.subr.mxu0 0.0
    %485 = vmatpush1.xpose.msra.mxu0 0.0
    %486 = vmatprep.subr.mxu0 0.0
    %487 = vmatpush1.xpose.msra.mxu0 0.0
    %488 = vmatprep.subr.mxu0 0.0
    %489 = vmatpush1.xpose.msra.mxu0 0.0
    %490 = vmatprep.subr.mxu0 0.0
    %491 = vmatpush1.xpose.msra.mxu0 0.0
    %492 = vmatprep.subr.mxu0 0.0
    %493 = vmatpush1.xpose.msra.mxu0 0.0
    %494 = vmatprep.subr.mxu0 0.0
    %495 = vmatpush1.xpose.msra.mxu0 0.0
    %496 = vmatprep.subr.mxu0 0.0
    %497 = vmatpush1.xpose.msra.mxu0 0.0
    %498 = vmatprep.subr.mxu0 0.0
    %499 = vmatpush1.xpose.msra.mxu0 0.0
    %500 = vmatprep.subr.mxu0 0.0
    %501 = vmatpush1.xpose.msra.mxu0 0.0
    %502 = vmatprep.subr.mxu0 0.0
    %503 = vmatpush1.xpose.msra.mxu0 0.0
    %504 = vmatprep.subr.mxu0 0.0
    %505 = vmatpush1.xpose.msra.mxu0 0.0
    %506 = vmatprep.subr.mxu0 0.0
    %507 = vmatpush1.xpose.msra.mxu0 0.0
    %508 = vmatprep.mubr.f32.mxu0 0.0
    %509 = vmatmul.mubr.f32.gmra.mrb[0].mxu0 %v439
    %v510 = vpop.f32.mrb[0].mxu0
    %v511 = vadd.f32 0.0, %v510
    %v512 = vpop.f32.mrb[0].mxu0
    %513 = vdwg.mxu0
    %v515 = vsel %vm429, %v433, 0
    %v518 = vsel %vm429, %v435, 0
    %520 = vmatprep.subr.mxu0 0.0
    %521 = vmatpush1.xpose.msra.mxu0 %v518
    %522 = vmatprep.subr.mxu0 0.0
    %523 = vmatpush1.xpose.msra.mxu0 0.0
    %524 = vmatprep.subr.mxu0 0.0
    %525 = vmatpush1.xpose.msra.mxu0 0.0
    %526 = vmatprep.subr.mxu0 0.0
    %527 = vmatpush1.xpose.msra.mxu0 0.0
    %528 = vmatprep.subr.mxu0 0.0
    %529 = vmatpush1.xpose.msra.mxu0 0.0
    %530 = vmatprep.subr.mxu0 0.0
    %531 = vmatpush1.xpose.msra.mxu0 0.0
    %532 = vmatprep.subr.mxu0 0.0
    %533 = vmatpush1.xpose.msra.mxu0 0.0
    %534 = vmatprep.subr.mxu0 0.0
    %535 = vmatpush1.xpose.msra.mxu0 0.0
    %536 = vmatprep.subr.mxu0 0.0
    %537 = vmatpush1.xpose.msra.mxu0 0.0
    %538 = vmatprep.subr.mxu0 0.0
    %539 = vmatpush1.xpose.msra.mxu0 0.0
    %540 = vmatprep.subr.mxu0 0.0
    %541 = vmatpush1.xpose.msra.mxu0 0.0
    %542 = vmatprep.subr.mxu0 0.0
    %543 = vmatpush1.xpose.msra.mxu0 0.0
    %544 = vmatprep.subr.mxu0 0.0
    %545 = vmatpush1.xpose.msra.mxu0 0.0
    %546 = vmatprep.subr.mxu0 0.0
    %547 = vmatpush1.xpose.msra.mxu0 0.0
    %548 = vmatprep.subr.mxu0 0.0
    %549 = vmatpush1.xpose.msra.mxu0 0.0
    %550 = vmatprep.subr.mxu0 0.0
    %551 = vmatpush1.xpose.msra.mxu0 0.0
    %552 = vmatprep.subr.mxu0 0.0
    %553 = vmatpush1.xpose.msra.mxu0 0.0
    %554 = vmatprep.subr.mxu0 0.0
    %555 = vmatpush1.xpose.msra.mxu0 0.0
    %556 = vmatprep.subr.mxu0 0.0
    %557 = vmatpush1.xpose.msra.mxu0 0.0
    %558 = vmatprep.subr.mxu0 0.0
    %559 = vmatpush1.xpose.msra.mxu0 0.0
    %560 = vmatprep.subr.mxu0 0.0
    %561 = vmatpush1.xpose.msra.mxu0 0.0
    %562 = vmatprep.subr.mxu0 0.0
    %563 = vmatpush1.xpose.msra.mxu0 0.0
    %564 = vmatprep.subr.mxu0 0.0
    %565 = vmatpush1.xpose.msra.mxu0 0.0
    %566 = vmatprep.subr.mxu0 0.0
    %567 = vmatpush1.xpose.msra.mxu0 0.0
    %568 = vmatprep.subr.mxu0 0.0
    %569 = vmatpush1.xpose.msra.mxu0 0.0
    %570 = vmatprep.subr.mxu0 0.0
    %571 = vmatpush1.xpose.msra.mxu0 0.0
    %572 = vmatprep.subr.mxu0 0.0
    %573 = vmatpush1.xpose.msra.mxu0 0.0
    %574 = vmatprep.subr.mxu0 0.0
    %575 = vmatpush1.xpose.msra.mxu0 0.0
    %576 = vmatprep.subr.mxu0 0.0
    %577 = vmatpush1.xpose.msra.mxu0 0.0
    %578 = vmatprep.subr.mxu0 0.0
    %579 = vmatpush1.xpose.msra.mxu0 0.0
    %580 = vmatprep.subr.mxu0 0.0
    %581 = vmatpush1.xpose.msra.mxu0 0.0
    %582 = vmatprep.subr.mxu0 0.0
    %583 = vmatpush1.xpose.msra.mxu0 0.0
    %584 = vmatprep.mubr.f32.mxu0 0.0
    %585 = vmatmul.mubr.f32.gmra.mrb[0].mxu0 %v515
    %v586 = vpop.f32.mrb[0].mxu0
    %v587 = vadd.f32 0.0, %v586
    %v588 = vpop.f32.mrb[0].mxu0
    %589 = vdwg.mxu0
    %v590 = vsel %vm429, %v511, -inf
    %591 = vmax.xlane.f32.xlu0 %v590
    %v592 = vpop.xlane.xlu0 %591
    %v593 = vsel %vm429, %v587, -inf
    %594 = vmax.xlane.f32.xlu0 %v593
    %v595 = vpop.xlane.xlu0 %594
    %v596 = vsub.f32 %v511, %v592
    %v597 = vsub.f32 %v587, %v595
    %v598 = vmul.f32 %v596, 1.442695
    %v599 = vpow.pop %v598
    %v600 = vmul.f32 %v597, 1.442695
    %v601 = vpow.pop %v600
    %v602 = vsel %vm429, %v599, 0.0
    %603 = vadd.xlane.f32.xlu0 %v602
    %v604 = vpop.xlane.xlu0 %603
    %v605 = vsel %vm429, %v601, 0.0
    %606 = vadd.xlane.f32.xlu0 %v605
    %v607 = vpop.xlane.xlu0 %606
    %v608 = vrcp.pop %v604
    %v609 = vrcp.pop %v607
    %v610 = vmul.f32 %v599, %v608
    %v611 = vmul.f32 %v601, %v609
    %v612 = vld [vmem:[#allocation6] sm:$0xff]
    %v613 = vld [vmem:[#allocation6 + $0x8] sm:$0xff]
    %v614 = vadd.f32 %v612, %v610
    %v615 = vadd.f32 %v613, %v611
    %616 = vst.msk [vmem:[#allocation6] sm:$0xff] %vm429, %v614
    %617 = vst.msk [vmem:[#allocation6 + $0x8] sm:$0xff] %vm429, %v615
    %v619 = vsel %vm429, %v610, 0
    %621 = vmatprep.subr.mxu0 0.0
    %622 = vmatpush1.msra.mxu0 %v436
    %623 = vmatprep.subr.mxu0 0.0
    %624 = vmatpush1.msra.mxu0 0.0
    %625 = vmatprep.subr.mxu0 0.0
    %626 = vmatpush1.msra.mxu0 0.0
    %627 = vmatprep.subr.mxu0 0.0
    %628 = vmatpush1.msra.mxu0 0.0
    %629 = vmatprep.subr.mxu0 0.0
    %630 = vmatpush1.msra.mxu0 0.0
    %631 = vmatprep.subr.mxu0 0.0
    %632 = vmatpush1.msra.mxu0 0.0
    %633 = vmatprep.subr.mxu0 0.0
    %634 = vmatpush1.msra.mxu0 0.0
    %635 = vmatprep.subr.mxu0 0.0
    %636 = vmatpush1.msra.mxu0 0.0
    %637 = vmatprep.subr.mxu0 0.0
    %638 = vmatpush1.msra.mxu0 0.0
    %639 = vmatprep.subr.mxu0 0.0
    %640 = vmatpush1.msra.mxu0 0.0
    %641 = vmatprep.subr.mxu0 0.0
    %642 = vmatpush1.msra.mxu0 0.0
    %643 = vmatprep.subr.mxu0 0.0
    %644 = vmatpush1.msra.mxu0 0.0
    %645 = vmatprep.subr.mxu0 0.0
    %646 = vmatpush1.msra.mxu0 0.0
    %647 = vmatprep.subr.mxu0 0.0
    %648 = vmatpush1.msra.mxu0 0.0
    %649 = vmatprep.subr.mxu0 0.0
    %650 = vmatpush1.msra.mxu0 0.0
    %651 = vmatprep.subr.mxu0 0.0
    %652 = vmatpush1.msra.mxu0 0.0
    %653 = vmatprep.subr.mxu0 0.0
    %654 = vmatpush1.msra.mxu0 0.0
    %655 = vmatprep.subr.mxu0 0.0
    %656 = vmatpush1.msra.mxu0 0.0
    %657 = vmatprep.subr.mxu0 0.0
    %658 = vmatpush1.msra.mxu0 0.0
    %659 = vmatprep.subr.mxu0 0.0
    %660 = vmatpush1.msra.mxu0 0.0
    %661 = vmatprep.subr.mxu0 0.0
    %662 = vmatpush1.msra.mxu0 0.0
    %663 = vmatprep.subr.mxu0 0.0
    %664 = vmatpush1.msra.mxu0 0.0
    %665 = vmatprep.subr.mxu0 0.0
    %666 = vmatpush1.msra.mxu0 0.0
    %667 = vmatprep.subr.mxu0 0.0
    %668 = vmatpush1.msra.mxu0 0.0
    %669 = vmatprep.subr.mxu0 0.0
    %670 = vmatpush1.msra.mxu0 0.0
    %671 = vmatprep.subr.mxu0 0.0
    %672 = vmatpush1.msra.mxu0 0.0
    %673 = vmatprep.subr.mxu0 0.0
    %674 = vmatpush1.msra.mxu0 0.0
    %675 = vmatprep.subr.mxu0 0.0
    %676 = vmatpush1.msra.mxu0 0.0
    %677 = vmatprep.subr.mxu0 0.0
    %678 = vmatpush1.msra.mxu0 0.0
    %679 = vmatprep.subr.mxu0 0.0
    %680 = vmatpush1.msra.mxu0 0.0
    %681 = vmatprep.subr.mxu0 0.0
    %682 = vmatpush1.msra.mxu0 0.0
    %683 = vmatprep.subr.mxu0 0.0
    %684 = vmatpush1.msra.mxu0 0.0
    %685 = vmatprep.mubr.f32.mxu0 0.0
    %686 = vmatmul.mubr.f32.gmra.mrb[0].mxu0 %v619
    %v687 = vpop.f32.mrb[0].mxu0
    %v688 = vadd.f32 0.0, %v687
    %v689 = vpop.f32.mrb[0].mxu0
    %690 = vdwg.mxu0
    %v692 = vsel %vm429, %v611, 0
    %694 = vmatprep.subr.mxu0 0.0
    %695 = vmatpush1.msra.mxu0 %v437
    %696 = vmatprep.subr.mxu0 0.0
    %697 = vmatpush1.msra.mxu0 0.0
    %698 = vmatprep.subr.mxu0 0.0
    %699 = vmatpush1.msra.mxu0 0.0
    %700 = vmatprep.subr.mxu0 0.0
    %701 = vmatpush1.msra.mxu0 0.0
    %702 = vmatprep.subr.mxu0 0.0
    %703 = vmatpush1.msra.mxu0 0.0
    %704 = vmatprep.subr.mxu0 0.0
    %705 = vmatpush1.msra.mxu0 0.0
    %706 = vmatprep.subr.mxu0 0.0
    %707 = vmatpush1.msra.mxu0 0.0
    %708 = vmatprep.subr.mxu0 0.0
    %709 = vmatpush1.msra.mxu0 0.0
    %710 = vmatprep.subr.mxu0 0.0
    %711 = vmatpush1.msra.mxu0 0.0
    %712 = vmatprep.subr.mxu0 0.0
    %713 = vmatpush1.msra.mxu0 0.0
    %714 = vmatprep.subr.mxu0 0.0
    %715 = vmatpush1.msra.mxu0 0.0
    %716 = vmatprep.subr.mxu0 0.0
    %717 = vmatpush1.msra.mxu0 0.0
    %718 = vmatprep.subr.mxu0 0.0
    %719 = vmatpush1.msra.mxu0 0.0
    %720 = vmatprep.subr.mxu0 0.0
    %721 = vmatpush1.msra.mxu0 0.0
    %722 = vmatprep.subr.mxu0 0.0
    %723 = vmatpush1.msra.mxu0 0.0
    %724 = vmatprep.subr.mxu0 0.0
    %725 = vmatpush1.msra.mxu0 0.0
    %726 = vmatprep.subr.mxu0 0.0
    %727 = vmatpush1.msra.mxu0 0.0
    %728 = vmatprep.subr.mxu0 0.0
    %729 = vmatpush1.msra.mxu0 0.0
    %730 = vmatprep.subr.mxu0 0.0
    %731 = vmatpush1.msra.mxu0 0.0
    %732 = vmatprep.subr.mxu0 0.0
    %733 = vmatpush1.msra.mxu0 0.0
    %734 = vmatprep.subr.mxu0 0.0
    %735 = vmatpush1.msra.mxu0 0.0
    %736 = vmatprep.subr.mxu0 0.0
    %737 = vmatpush1.msra.mxu0 0.0
    %738 = vmatprep.subr.mxu0 0.0
    %739 = vmatpush1.msra.mxu0 0.0
    %740 = vmatprep.subr.mxu0 0.0
    %741 = vmatpush1.msra.mxu0 0.0
    %742 = vmatprep.subr.mxu0 0.0
    %743 = vmatpush1.msra.mxu0 0.0
    %744 = vmatprep.subr.mxu0 0.0
    %745 = vmatpush1.msra.mxu0 0.0
    %746 = vmatprep.subr.mxu0 0.0
    %747 = vmatpush1.msra.mxu0 0.0
    %748 = vmatprep.subr.mxu0 0.0
    %749 = vmatpush1.msra.mxu0 0.0
    %750 = vmatprep.subr.mxu0 0.0
    %751 = vmatpush1.msra.mxu0 0.0
    %752 = vmatprep.subr.mxu0 0.0
    %753 = vmatpush1.msra.mxu0 0.0
    %754 = vmatprep.subr.mxu0 0.0
    %755 = vmatpush1.msra.mxu0 0.0
    %756 = vmatprep.subr.mxu0 0.0
    %757 = vmatpush1.msra.mxu0 0.0
    %758 = vmatprep.mubr.f32.mxu0 0.0
    %759 = vmatmul.mubr.f32.gmra.mrb[0].mxu0 %v692
    %v760 = vpop.f32.mrb[0].mxu0
    %v761 = vadd.f32 0.0, %v760
    %v762 = vpop.f32.mrb[0].mxu0
    %763 = vdwg.mxu0
    %764 = vst.msk [vmem:[#allocation5] sm:$0xff] %vm429, %v688
    %765 = vst.msk [vmem:[#allocation5 + $0x8] sm:$0xff] %vm429, %v761
    %v766 = vld [vmem:[#allocation2] sm:$0xff]
    %v767 = vld [vmem:[#allocation2 + $0x8] sm:$0xff]
    %v768 = vld [vmem:[#allocation3] sm:$0xff]
    %v769 = vld [vmem:[#allocation3 + $0x8] sm:$0xff]
    %v770 = vld [vmem:[#allocation4] sm:$0xff]
    %v771 = vld [vmem:[#allocation4 + $0x8] sm:$0xff]
    %773 = vrot.lane.b32.xlu0 %v766, 120
    %v774 = vpop.permute.xlu0 %773
    %776 = vrot.lane.b32.xlu0 %v768, 120
    %v777 = vpop.permute.xlu0 %776
    %v778 = vsel %vm429, %v774, 0
    %v780 = vsel %vm429, %v777, 0
    %782 = vmatprep.subr.mxu0 0.0
    %783 = vmatpush1.xpose.msra.mxu0 %v780
    %784 = vmatprep.subr.mxu0 0.0
    %785 = vmatpush1.xpose.msra.mxu0 0.0
    %786 = vmatprep.subr.mxu0 0.0
    %787 = vmatpush1.xpose.msra.mxu0 0.0
    %788 = vmatprep.subr.mxu0 0.0
    %789 = vmatpush1.xpose.msra.mxu0 0.0
    %790 = vmatprep.subr.mxu0 0.0
    %791 = vmatpush1.xpose.msra.mxu0 0.0
    %792 = vmatprep.subr.mxu0 0.0
    %793 = vmatpush1.xpose.msra.mxu0 0.0
    %794 = vmatprep.subr.mxu0 0.0
    %795 = vmatpush1.xpose.msra.mxu0 0.0
    %796 = vmatprep.subr.mxu0 0.0
    %797 = vmatpush1.xpose.msra.mxu0 0.0
    %798 = vmatprep.subr.mxu0 0.0
    %799 = vmatpush1.xpose.msra.mxu0 0.0
    %800 = vmatprep.subr.mxu0 0.0
    %801 = vmatpush1.xpose.msra.mxu0 0.0
    %802 = vmatprep.subr.mxu0 0.0
    %803 = vmatpush1.xpose.msra.mxu0 0.0
    %804 = vmatprep.subr.mxu0 0.0
    %805 = vmatpush1.xpose.msra.mxu0 0.0
    %806 = vmatprep.subr.mxu0 0.0
    %807 = vmatpush1.xpose.msra.mxu0 0.0
    %808 = vmatprep.subr.mxu0 0.0
    %809 = vmatpush1.xpose.msra.mxu0 0.0
    %810 = vmatprep.subr.mxu0 0.0
    %811 = vmatpush1.xpose.msra.mxu0 0.0
    %812 = vmatprep.subr.mxu0 0.0
    %813 = vmatpush1.xpose.msra.mxu0 0.0
    %814 = vmatprep.subr.mxu0 0.0
    %815 = vmatpush1.xpose.msra.mxu0 0.0
    %816 = vmatprep.subr.mxu0 0.0
    %817 = vmatpush1.xpose.msra.mxu0 0.0
    %818 = vmatprep.subr.mxu0 0.0
    %819 = vmatpush1.xpose.msra.mxu0 0.0
    %820 = vmatprep.subr.mxu0 0.0
    %821 = vmatpush1.xpose.msra.mxu0 0.0
    %822 = vmatprep.subr.mxu0 0.0
    %823 = vmatpush1.xpose.msra.mxu0 0.0
    %824 = vmatprep.subr.mxu0 0.0
    %825 = vmatpush1.xpose.msra.mxu0 0.0
    %826 = vmatprep.subr.mxu0 0.0
    %827 = vmatpush1.xpose.msra.mxu0 0.0
    %828 = vmatprep.subr.mxu0 0.0
    %829 = vmatpush1.xpose.msra.mxu0 0.0
    %830 = vmatprep.subr.mxu0 0.0
    %831 = vmatpush1.xpose.msra.mxu0 0.0
    %832 = vmatprep.subr.mxu0 0.0
    %833 = vmatpush1.xpose.msra.mxu0 0.0
    %834 = vmatprep.subr.mxu0 0.0
    %835 = vmatpush1.xpose.msra.mxu0 0.0
    %836 = vmatprep.subr.mxu0 0.0
    %837 = vmatpush1.xpose.msra.mxu0 0.0
    %838 = vmatprep.subr.mxu0 0.0
    %839 = vmatpush1.xpose.msra.mxu0 0.0
    %840 = vmatprep.subr.mxu0 0.0
    %841 = vmatpush1.xpose.msra.mxu0 0.0
    %842 = vmatprep.subr.mxu0 0.0
    %843 = vmatpush1.xpose.msra.mxu0 0.0
    %844 = vmatprep.subr.mxu0 0.0
    %845 = vmatpush1.xpose.msra.mxu0 0.0
    %846 = vmatprep.mubr.f32.mxu0 0.0
    %847 = vmatmul.mubr.f32.gmra.mrb[0].mxu0 %v778
    %v848 = vpop.f32.mrb[0].mxu0
    %v849 = vadd.f32 0.0, %v848
    %v850 = vpop.f32.mrb[0].mxu0
    %851 = vdwg.mxu0
    %853 = vrot.lane.b32.xlu0 %v767, 120
    %v854 = vpop.permute.xlu0 %853
    %856 = vrot.lane.b32.xlu0 %v769, 120
    %v857 = vpop.permute.xlu0 %856
    %v858 = vsel %vm429, %v854, 0
    %v860 = vsel %vm429, %v857, 0
    %862 = vmatprep.subr.mxu0 0.0
    %863 = vmatpush1.xpose.msra.mxu0 %v860
    %864 = vmatprep.subr.mxu0 0.0
    %865 = vmatpush1.xpose.msra.mxu0 0.0
    %866 = vmatprep.subr.mxu0 0.0
    %867 = vmatpush1.xpose.msra.mxu0 0.0
    %868 = vmatprep.subr.mxu0 0.0
    %869 = vmatpush1.xpose.msra.mxu0 0.0
    %870 = vmatprep.subr.mxu0 0.0
    %871 = vmatpush1.xpose.msra.mxu0 0.0
    %872 = vmatprep.subr.mxu0 0.0
    %873 = vmatpush1.xpose.msra.mxu0 0.0
    %874 = vmatprep.subr.mxu0 0.0
    %875 = vmatpush1.xpose.msra.mxu0 0.0
    %876 = vmatprep.subr.mxu0 0.0
    %877 = vmatpush1.xpose.msra.mxu0 0.0
    %878 = vmatprep.subr.mxu0 0.0
    %879 = vmatpush1.xpose.msra.mxu0 0.0
    %880 = vmatprep.subr.mxu0 0.0
    %881 = vmatpush1.xpose.msra.mxu0 0.0
    %882 = vmatprep.subr.mxu0 0.0
    %883 = vmatpush1.xpose.msra.mxu0 0.0
    %884 = vmatprep.subr.mxu0 0.0
    %885 = vmatpush1.xpose.msra.mxu0 0.0
    %886 = vmatprep.subr.mxu0 0.0
    %887 = vmatpush1.xpose.msra.mxu0 0.0
    %888 = vmatprep.subr.mxu0 0.0
    %889 = vmatpush1.xpose.msra.mxu0 0.0
    %890 = vmatprep.subr.mxu0 0.0
    %891 = vmatpush1.xpose.msra.mxu0 0.0
    %892 = vmatprep.subr.mxu0 0.0
    %893 = vmatpush1.xpose.msra.mxu0 0.0
    %894 = vmatprep.subr.mxu0 0.0
    %895 = vmatpush1.xpose.msra.mxu0 0.0
    %896 = vmatprep.subr.mxu0 0.0
    %897 = vmatpush1.xpose.msra.mxu0 0.0
    %898 = vmatprep.subr.mxu0 0.0
    %899 = vmatpush1.xpose.msra.mxu0 0.0
    %900 = vmatprep.subr.mxu0 0.0
    %901 = vmatpush1.xpose.msra.mxu0 0.0
    %902 = vmatprep.subr.mxu0 0.0
    %903 = vmatpush1.xpose.msra.mxu0 0.0
    %904 = vmatprep.subr.mxu0 0.0
    %905 = vmatpush1.xpose.msra.mxu0 0.0
    %906 = vmatprep.subr.mxu0 0.0
    %907 = vmatpush1.xpose.msra.mxu0 0.0
    %908 = vmatprep.subr.mxu0 0.0
    %909 = vmatpush1.xpose.msra.mxu0 0.0
    %910 = vmatprep.subr.mxu0 0.0
    %911 = vmatpush1.xpose.msra.mxu0 0.0
    %912 = vmatprep.subr.mxu0 0.0
    %913 = vmatpush1.xpose.msra.mxu0 0.0
    %914 = vmatprep.subr.mxu0 0.0
    %915 = vmatpush1.xpose.msra.mxu0 0.0
    %916 = vmatprep.subr.mxu0 0.0
    %917 = vmatpush1.xpose.msra.mxu0 0.0
    %918 = vmatprep.subr.mxu0 0.0
    %919 = vmatpush1.xpose.msra.mxu0 0.0
    %920 = vmatprep.subr.mxu0 0.0
    %921 = vmatpush1.xpose.msra.mxu0 0.0
    %922 = vmatprep.subr.mxu0 0.0
    %923 = vmatpush1.xpose.msra.mxu0 0.0
    %924 = vmatprep.subr.mxu0 0.0
    %925 = vmatpush1.xpose.msra.mxu0 0.0
    %926 = vmatprep.mubr.f32.mxu0 0.0
    %927 = vmatmul.mubr.f32.gmra.mrb[0].mxu0 %v858
    %v928 = vpop.f32.mrb[0].mxu0
    %v929 = vadd.f32 0.0, %v928
    %v930 = vpop.f32.mrb[0].mxu0
    %931 = vdwg.mxu0
    %v932 = vsel %vm429, %v849, -inf
    %933 = vmax.xlane.f32.xlu0 %v932
    %v934 = vpop.xlane.xlu0 %933
    %v935 = vsel %vm429, %v929, -inf
    %936 = vmax.xlane.f32.xlu0 %v935
    %v937 = vpop.xlane.xlu0 %936
    %v938 = vsub.f32 %v849, %v934
    %v939 = vsub.f32 %v929, %v937
    %v940 = vmul.f32 %v938, 1.442695
    %v941 = vpow.pop %v940
    %v942 = vmul.f32 %v939, 1.442695
    %v943 = vpow.pop %v942
    %v944 = vsel %vm429, %v941, 0.0
    %945 = vadd.xlane.f32.xlu0 %v944
    %v946 = vpop.xlane.xlu0 %945
    %v947 = vsel %vm429, %v943, 0.0
    %948 = vadd.xlane.f32.xlu0 %v947
    %v949 = vpop.xlane.xlu0 %948
    %v950 = vrcp.pop %v946
    %v951 = vrcp.pop %v949
    %v952 = vmul.f32 %v941, %v950
    %v953 = vmul.f32 %v943, %v951
    %v954 = vld [vmem:[#allocation6] sm:$0xff]
    %v955 = vld [vmem:[#allocation6 + $0x8] sm:$0xff]
    %v956 = vadd.f32 %v954, %v952
    %v957 = vadd.f32 %v955, %v953
    %958 = vst.msk [vmem:[#allocation6] sm:$0xff] %vm429, %v956
    %959 = vst.msk [vmem:[#allocation6 + $0x8] sm:$0xff] %vm429, %v957
    %961 = vrot.lane.b32.xlu0 %v770, 120
    %v962 = vpop.permute.xlu0 %961
    %v965 = vsel %vm429, %v952, 0
    %967 = vmatprep.subr.mxu0 0.0
    %968 = vmatpush1.msra.mxu0 %v962
    %969 = vmatprep.subr.mxu0 0.0
    %970 = vmatpush1.msra.mxu0 0.0
    %971 = vmatprep.subr.mxu0 0.0
    %972 = vmatpush1.msra.mxu0 0.0
    %973 = vmatprep.subr.mxu0 0.0
    %974 = vmatpush1.msra.mxu0 0.0
    %975 = vmatprep.subr.mxu0 0.0
    %976 = vmatpush1.msra.mxu0 0.0
    %977 = vmatprep.subr.mxu0 0.0
    %978 = vmatpush1.msra.mxu0 0.0
    %979 = vmatprep.subr.mxu0 0.0
    %980 = vmatpush1.msra.mxu0 0.0
    %981 = vmatprep.subr.mxu0 0.0
    %982 = vmatpush1.msra.mxu0 0.0
    %983 = vmatprep.subr.mxu0 0.0
    %984 = vmatpush1.msra.mxu0 0.0
    %985 = vmatprep.subr.mxu0 0.0
    %986 = vmatpush1.msra.mxu0 0.0
    %987 = vmatprep.subr.mxu0 0.0
    %988 = vmatpush1.msra.mxu0 0.0
    %989 = vmatprep.subr.mxu0 0.0
    %990 = vmatpush1.msra.mxu0 0.0
    %991 = vmatprep.subr.mxu0 0.0
    %992 = vmatpush1.msra.mxu0 0.0
    %993 = vmatprep.subr.mxu0 0.0
    %994 = vmatpush1.msra.mxu0 0.0
    %995 = vmatprep.subr.mxu0 0.0
    %996 = vmatpush1.msra.mxu0 0.0
    %997 = vmatprep.subr.mxu0 0.0
    %998 = vmatpush1.msra.mxu0 0.0
    %999 = vmatprep.subr.mxu0 0.0
    %1000 = vmatpush1.msra.mxu0 0.0
    %1001 = vmatprep.subr.mxu0 0.0
    %1002 = vmatpush1.msra.mxu0 0.0
    %1003 = vmatprep.subr.mxu0 0.0
    %1004 = vmatpush1.msra.mxu0 0.0
    %1005 = vmatprep.subr.mxu0 0.0
    %1006 = vmatpush1.msra.mxu0 0.0
    %1007 = vmatprep.subr.mxu0 0.0
    %1008 = vmatpush1.msra.mxu0 0.0
    %1009 = vmatprep.subr.mxu0 0.0
    %1010 = vmatpush1.msra.mxu0 0.0
    %1011 = vmatprep.subr.mxu0 0.0
    %1012 = vmatpush1.msra.mxu0 0.0
    %1013 = vmatprep.subr.mxu0 0.0
    %1014 = vmatpush1.msra.mxu0 0.0
    %1015 = vmatprep.subr.mxu0 0.0
    %1016 = vmatpush1.msra.mxu0 0.0
    %1017 = vmatprep.subr.mxu0 0.0
    %1018 = vmatpush1.msra.mxu0 0.0
    %1019 = vmatprep.subr.mxu0 0.0
    %1020 = vmatpush1.msra.mxu0 0.0
    %1021 = vmatprep.subr.mxu0 0.0
    %1022 = vmatpush1.msra.mxu0 0.0
    %1023 = vmatprep.subr.mxu0 0.0
    %1024 = vmatpush1.msra.mxu0 0.0
    %1025 = vmatprep.subr.mxu0 0.0
    %1026 = vmatpush1.msra.mxu0 0.0
    %1027 = vmatprep.subr.mxu0 0.0
    %1028 = vmatpush1.msra.mxu0 0.0
    %1029 = vmatprep.subr.mxu0 0.0
    %1030 = vmatpush1.msra.mxu0 0.0
    %1031 = vmatprep.mubr.f32.mxu0 0.0
    %1032 = vmatmul.mubr.f32.gmra.mrb[0].mxu0 %v965
    %v1033 = vpop.f32.mrb[0].mxu0
    %v1034 = vadd.f32 0.0, %v1033
    %v1035 = vpop.f32.mrb[0].mxu0
    %1036 = vdwg.mxu0
    %1038 = vrot.lane.b32.xlu0 %v771, 120
    %v1039 = vpop.permute.xlu0 %1038
    %v1042 = vsel %vm429, %v953, 0
    %1044 = vmatprep.subr.mxu0 0.0
    %1045 = vmatpush1.msra.mxu0 %v1039
    %1046 = vmatprep.subr.mxu0 0.0
    %1047 = vmatpush1.msra.mxu0 0.0
    %1048 = vmatprep.subr.mxu0 0.0
    %1049 = vmatpush1.msra.mxu0 0.0
    %1050 = vmatprep.subr.mxu0 0.0
    %1051 = vmatpush1.msra.mxu0 0.0
    %1052 = vmatprep.subr.mxu0 0.0
    %1053 = vmatpush1.msra.mxu0 0.0
    %1054 = vmatprep.subr.mxu0 0.0
    %1055 = vmatpush1.msra.mxu0 0.0
    %1056 = vmatprep.subr.mxu0 0.0
    %1057 = vmatpush1.msra.mxu0 0.0
    %1058 = vmatprep.subr.mxu0 0.0
    %1059 = vmatpush1.msra.mxu0 0.0
    %1060 = vmatprep.subr.mxu0 0.0
    %1061 = vmatpush1.msra.mxu0 0.0
    %1062 = vmatprep.subr.mxu0 0.0
    %1063 = vmatpush1.msra.mxu0 0.0
    %1064 = vmatprep.subr.mxu0 0.0
    %1065 = vmatpush1.msra.mxu0 0.0
    %1066 = vmatprep.subr.mxu0 0.0
    %1067 = vmatpush1.msra.mxu0 0.0
    %1068 = vmatprep.subr.mxu0 0.0
    %1069 = vmatpush1.msra.mxu0 0.0
    %1070 = vmatprep.subr.mxu0 0.0
    %1071 = vmatpush1.msra.mxu0 0.0
    %1072 = vmatprep.subr.mxu0 0.0
    %1073 = vmatpush1.msra.mxu0 0.0
    %1074 = vmatprep.subr.mxu0 0.0
    %1075 = vmatpush1.msra.mxu0 0.0
    %1076 = vmatprep.subr.mxu0 0.0
    %1077 = vmatpush1.msra.mxu0 0.0
    %1078 = vmatprep.subr.mxu0 0.0
    %1079 = vmatpush1.msra.mxu0 0.0
    %1080 = vmatprep.subr.mxu0 0.0
    %1081 = vmatpush1.msra.mxu0 0.0
    %1082 = vmatprep.subr.mxu0 0.0
    %1083 = vmatpush1.msra.mxu0 0.0
    %1084 = vmatprep.subr.mxu0 0.0
    %1085 = vmatpush1.msra.mxu0 0.0
    %1086 = vmatprep.subr.mxu0 0.0
    %1087 = vmatpush1.msra.mxu0 0.0
    %1088 = vmatprep.subr.mxu0 0.0
    %1089 = vmatpush1.msra.mxu0 0.0
    %1090 = vmatprep.subr.mxu0 0.0
    %1091 = vmatpush1.msra.mxu0 0.0
    %1092 = vmatprep.subr.mxu0 0.0
    %1093 = vmatpush1.msra.mxu0 0.0
    %1094 = vmatprep.subr.mxu0 0.0
    %1095 = vmatpush1.msra.mxu0 0.0
    %1096 = vmatprep.subr.mxu0 0.0
    %1097 = vmatpush1.msra.mxu0 0.0
    %1098 = vmatprep.subr.mxu0 0.0
    %1099 = vmatpush1.msra.mxu0 0.0
    %1100 = vmatprep.subr.mxu0 0.0
    %1101 = vmatpush1.msra.mxu0 0.0
    %1102 = vmatprep.subr.mxu0 0.0
    %1103 = vmatpush1.msra.mxu0 0.0
    %1104 = vmatprep.subr.mxu0 0.0
    %1105 = vmatpush1.msra.mxu0 0.0
    %1106 = vmatprep.subr.mxu0 0.0
    %1107 = vmatpush1.msra.mxu0 0.0
    %1108 = vmatprep.mubr.f32.mxu0 0.0
    %1109 = vmatmul.mubr.f32.gmra.mrb[0].mxu0 %v1042
    %v1110 = vpop.f32.mrb[0].mxu0
    %v1111 = vadd.f32 0.0, %v1110
    %v1112 = vpop.f32.mrb[0].mxu0
    %1113 = vdwg.mxu0
    %1116 = vrot.lane.b32.xlu0 %v1034, 8
    %v1117 = vpop.permute.xlu0 %1116
    %1118 = vrot.lane.b32.xlu0 %v1111, 8
    %v1119 = vpop.permute.xlu0 %1118
    %vm1122 = vcmask 130112
    %1123 = vst.msk [vmem:[#allocation5] sm:$0xff] %vm1122, %v1117
    %1124 = vst.msk [vmem:[#allocation5 + $0x8] sm:$0xff] %vm1122, %v1119
    %v1125 = vld [vmem:[#allocation2] sm:$0xff]
    %v1126 = vld [vmem:[#allocation2 + $0x8] sm:$0xff]
    %v1127 = vld [vmem:[#allocation3] sm:$0xff]
    %v1128 = vld [vmem:[#allocation3 + $0x8] sm:$0xff]
    %v1129 = vld [vmem:[#allocation4] sm:$0xff]
    %v1130 = vld [vmem:[#allocation4 + $0x8] sm:$0xff]
    %1132 = vrot.lane.b32.xlu0 %v1125, 112
    %v1133 = vpop.permute.xlu0 %1132
    %1135 = vrot.lane.b32.xlu0 %v1127, 112
    %v1136 = vpop.permute.xlu0 %1135
    %v1137 = vsel %vm429, %v1133, 0
    %v1139 = vsel %vm429, %v1136, 0
    %1141 = vmatprep.subr.mxu0 0.0
    %1142 = vmatpush1.xpose.msra.mxu0 %v1139
    %1143 = vmatprep.subr.mxu0 0.0
    %1144 = vmatpush1.xpose.msra.mxu0 0.0
    %1145 = vmatprep.subr.mxu0 0.0
    %1146 = vmatpush1.xpose.msra.mxu0 0.0
    %1147 = vmatprep.subr.mxu0 0.0
    %1148 = vmatpush1.xpose.msra.mxu0 0.0
    %1149 = vmatprep.subr.mxu0 0.0
    %1150 = vmatpush1.xpose.msra.mxu0 0.0
    %1151 = vmatprep.subr.mxu0 0.0
    %1152 = vmatpush1.xpose.msra.mxu0 0.0
    %1153 = vmatprep.subr.mxu0 0.0
    %1154 = vmatpush1.xpose.msra.mxu0 0.0
    %1155 = vmatprep.subr.mxu0 0.0
    %1156 = vmatpush1.xpose.msra.mxu0 0.0
    %1157 = vmatprep.subr.mxu0 0.0
    %1158 = vmatpush1.xpose.msra.mxu0 0.0
    %1159 = vmatprep.subr.mxu0 0.0
    %1160 = vmatpush1.xpose.msra.mxu0 0.0
    %1161 = vmatprep.subr.mxu0 0.0
    %1162 = vmatpush1.xpose.msra.mxu0 0.0
    %1163 = vmatprep.subr.mxu0 0.0
    %1164 = vmatpush1.xpose.msra.mxu0 0.0
    %1165 = vmatprep.subr.mxu0 0.0
    %1166 = vmatpush1.xpose.msra.mxu0 0.0
    %1167 = vmatprep.subr.mxu0 0.0
    %1168 = vmatpush1.xpose.msra.mxu0 0.0
    %1169 = vmatprep.subr.mxu0 0.0
    %1170 = vmatpush1.xpose.msra.mxu0 0.0
    %1171 = vmatprep.subr.mxu0 0.0
    %1172 = vmatpush1.xpose.msra.mxu0 0.0
    %1173 = vmatprep.subr.mxu0 0.0
    %1174 = vmatpush1.xpose.msra.mxu0 0.0
    %1175 = vmatprep.subr.mxu0 0.0
    %1176 = vmatpush1.xpose.msra.mxu0 0.0
    %1177 = vmatprep.subr.mxu0 0.0
    %1178 = vmatpush1.xpose.msra.mxu0 0.0
    %1179 = vmatprep.subr.mxu0 0.0
    %1180 = vmatpush1.xpose.msra.mxu0 0.0
    %1181 = vmatprep.subr.mxu0 0.0
    %1182 = vmatpush1.xpose.msra.mxu0 0.0
    %1183 = vmatprep.subr.mxu0 0.0
    %1184 = vmatpush1.xpose.msra.mxu0 0.0
    %1185 = vmatprep.subr.mxu0 0.0
    %1186 = vmatpush1.xpose.msra.mxu0 0.0
    %1187 = vmatprep.subr.mxu0 0.0
    %1188 = vmatpush1.xpose.msra.mxu0 0.0
    %1189 = vmatprep.subr.mxu0 0.0
    %1190 = vmatpush1.xpose.msra.mxu0 0.0
    %1191 = vmatprep.subr.mxu0 0.0
    %1192 = vmatpush1.xpose.msra.mxu0 0.0
    %1193 = vmatprep.subr.mxu0 0.0
    %1194 = vmatpush1.xpose.msra.mxu0 0.0
    %1195 = vmatprep.subr.mxu0 0.0
    %1196 = vmatpush1.xpose.msra.mxu0 0.0
    %1197 = vmatprep.subr.mxu0 0.0
    %1198 = vmatpush1.xpose.msra.mxu0 0.0
    %1199 = vmatprep.subr.mxu0 0.0
    %1200 = vmatpush1.xpose.msra.mxu0 0.0
    %1201 = vmatprep.subr.mxu0 0.0
    %1202 = vmatpush1.xpose.msra.mxu0 0.0
    %1203 = vmatprep.subr.mxu0 0.0
    %1204 = vmatpush1.xpose.msra.mxu0 0.0
    %1205 = vmatprep.mubr.f32.mxu0 0.0
    %1206 = vmatmul.mubr.f32.gmra.mrb[0].mxu0 %v1137
    %v1207 = vpop.f32.mrb[0].mxu0
    %v1208 = vadd.f32 0.0, %v1207
    %v1209 = vpop.f32.mrb[0].mxu0
    %1210 = vdwg.mxu0
    %1212 = vrot.lane.b32.xlu0 %v1126, 112
    %v1213 = vpop.permute.xlu0 %1212
    %1215 = vrot.lane.b32.xlu0 %v1128, 112
    %v1216 = vpop.permute.xlu0 %1215
    %v1217 = vsel %vm429, %v1213, 0
    %v1219 = vsel %vm429, %v1216, 0
    %1221 = vmatprep.subr.mxu0 0.0
    %1222 = vmatpush1.xpose.msra.mxu0 %v1219
    %1223 = vmatprep.subr.mxu0 0.0
    %1224 = vmatpush1.xpose.msra.mxu0 0.0
    %1225 = vmatprep.subr.mxu0 0.0
    %1226 = vmatpush1.xpose.msra.mxu0 0.0
    %1227 = vmatprep.subr.mxu0 0.0
    %1228 = vmatpush1.xpose.msra.mxu0 0.0
    %1229 = vmatprep.subr.mxu0 0.0
    %1230 = vmatpush1.xpose.msra.mxu0 0.0
    %1231 = vmatprep.subr.mxu0 0.0
    %1232 = vmatpush1.xpose.msra.mxu0 0.0
    %1233 = vmatprep.subr.mxu0 0.0
    %1234 = vmatpush1.xpose.msra.mxu0 0.0
    %1235 = vmatprep.subr.mxu0 0.0
    %1236 = vmatpush1.xpose.msra.mxu0 0.0
    %1237 = vmatprep.subr.mxu0 0.0
    %1238 = vmatpush1.xpose.msra.mxu0 0.0
    %1239 = vmatprep.subr.mxu0 0.0
    %1240 = vmatpush1.xpose.msra.mxu0 0.0
    %1241 = vmatprep.subr.mxu0 0.0
    %1242 = vmatpush1.xpose.msra.mxu0 0.0
    %1243 = vmatprep.subr.mxu0 0.0
    %1244 = vmatpush1.xpose.msra.mxu0 0.0
    %1245 = vmatprep.subr.mxu0 0.0
    %1246 = vmatpush1.xpose.msra.mxu0 0.0
    %1247 = vmatprep.subr.mxu0 0.0
    %1248 = vmatpush1.xpose.msra.mxu0 0.0
    %1249 = vmatprep.subr.mxu0 0.0
    %1250 = vmatpush1.xpose.msra.mxu0 0.0
    %1251 = vmatprep.subr.mxu0 0.0
    %1252 = vmatpush1.xpose.msra.mxu0 0.0
    %1253 = vmatprep.subr.mxu0 0.0
    %1254 = vmatpush1.xpose.msra.mxu0 0.0
    %1255 = vmatprep.subr.mxu0 0.0
    %1256 = vmatpush1.xpose.msra.mxu0 0.0
    %1257 = vmatprep.subr.mxu0 0.0
    %1258 = vmatpush1.xpose.msra.mxu0 0.0
    %1259 = vmatprep.subr.mxu0 0.0
    %1260 = vmatpush1.xpose.msra.mxu0 0.0
    %1261 = vmatprep.subr.mxu0 0.0
    %1262 = vmatpush1.xpose.msra.mxu0 0.0
    %1263 = vmatprep.subr.mxu0 0.0
    %1264 = vmatpush1.xpose.msra.mxu0 0.0
    %1265 = vmatprep.subr.mxu0 0.0
    %1266 = vmatpush1.xpose.msra.mxu0 0.0
    %1267 = vmatprep.subr.mxu0 0.0
    %1268 = vmatpush1.xpose.msra.mxu0 0.0
    %1269 = vmatprep.subr.mxu0 0.0
    %1270 = vmatpush1.xpose.msra.mxu0 0.0
    %1271 = vmatprep.subr.mxu0 0.0
    %1272 = vmatpush1.xpose.msra.mxu0 0.0
    %1273 = vmatprep.subr.mxu0 0.0
    %1274 = vmatpush1.xpose.msra.mxu0 0.0
    %1275 = vmatprep.subr.mxu0 0.0
    %1276 = vmatpush1.xpose.msra.mxu0 0.0
    %1277 = vmatprep.subr.mxu0 0.0
    %1278 = vmatpush1.xpose.msra.mxu0 0.0
    %1279 = vmatprep.subr.mxu0 0.0
    %1280 = vmatpush1.xpose.msra.mxu0 0.0
    %1281 = vmatprep.subr.mxu0 0.0
    %1282 = vmatpush1.xpose.msra.mxu0 0.0
    %1283 = vmatprep.subr.mxu0 0.0
    %1284 = vmatpush1.xpose.msra.mxu0 0.0
    %1285 = vmatprep.mubr.f32.mxu0 0.0
    %1286 = vmatmul.mubr.f32.gmra.mrb[0].mxu0 %v1217
    %v1287 = vpop.f32.mrb[0].mxu0
    %v1288 = vadd.f32 0.0, %v1287
    %v1289 = vpop.f32.mrb[0].mxu0
    %1290 = vdwg.mxu0
    %v1291 = vsel %vm429, %v1208, -inf
    %1292 = vmax.xlane.f32.xlu0 %v1291
    %v1293 = vpop.xlane.xlu0 %1292
    %v1294 = vsel %vm429, %v1288, -inf
    %1295 = vmax.xlane.f32.xlu0 %v1294
    %v1296 = vpop.xlane.xlu0 %1295
    %v1297 = vsub.f32 %v1208, %v1293
    %v1298 = vsub.f32 %v1288, %v1296
    %v1299 = vmul.f32 %v1297, 1.442695
    %v1300 = vpow.pop %v1299
    %v1301 = vmul.f32 %v1298, 1.442695
    %v1302 = vpow.pop %v1301
    %v1303 = vsel %vm429, %v1300, 0.0
    %1304 = vadd.xlane.f32.xlu0 %v1303
    %v1305 = vpop.xlane.xlu0 %1304
    %v1306 = vsel %vm429, %v1302, 0.0
    %1307 = vadd.xlane.f32.xlu0 %v1306
    %v1308 = vpop.xlane.xlu0 %1307
    %v1309 = vrcp.pop %v1305
    %v1310 = vrcp.pop %v1308
    %v1311 = vmul.f32 %v1300, %v1309
    %v1312 = vmul.f32 %v1302, %v1310
    %v1313 = vld [vmem:[#allocation6] sm:$0xff]
    %v1314 = vld [vmem:[#allocation6 + $0x8] sm:$0xff]
    %v1315 = vadd.f32 %v1313, %v1311
    %v1316 = vadd.f32 %v1314, %v1312
    %1317 = vst.msk [vmem:[#allocation6] sm:$0xff] %vm429, %v1315
    %1318 = vst.msk [vmem:[#allocation6 + $0x8] sm:$0xff] %vm429, %v1316
    %1320 = vrot.lane.b32.xlu0 %v1129, 112
    %v1321 = vpop.permute.xlu0 %1320
    %v1324 = vsel %vm429, %v1311, 0
    %1326 = vmatprep.subr.mxu0 0.0
    %1327 = vmatpush1.msra.mxu0 %v1321
    %1328 = vmatprep.subr.mxu0 0.0
    %1329 = vmatpush1.msra.mxu0 0.0
    %1330 = vmatprep.subr.mxu0 0.0
    %1331 = vmatpush1.msra.mxu0 0.0
    %1332 = vmatprep.subr.mxu0 0.0
    %1333 = vmatpush1.msra.mxu0 0.0
    %1334 = vmatprep.subr.mxu0 0.0
    %1335 = vmatpush1.msra.mxu0 0.0
    %1336 = vmatprep.subr.mxu0 0.0
    %1337 = vmatpush1.msra.mxu0 0.0
    %1338 = vmatprep.subr.mxu0 0.0
    %1339 = vmatpush1.msra.mxu0 0.0
    %1340 = vmatprep.subr.mxu0 0.0
    %1341 = vmatpush1.msra.mxu0 0.0
    %1342 = vmatprep.subr.mxu0 0.0
    %1343 = vmatpush1.msra.mxu0 0.0
    %1344 = vmatprep.subr.mxu0 0.0
    %1345 = vmatpush1.msra.mxu0 0.0
    %1346 = vmatprep.subr.mxu0 0.0
    %1347 = vmatpush1.msra.mxu0 0.0
    %1348 = vmatprep.subr.mxu0 0.0
    %1349 = vmatpush1.msra.mxu0 0.0
    %1350 = vmatprep.subr.mxu0 0.0
    %1351 = vmatpush1.msra.mxu0 0.0
    %1352 = vmatprep.subr.mxu0 0.0
    %1353 = vmatpush1.msra.mxu0 0.0
    %1354 = vmatprep.subr.mxu0 0.0
    %1355 = vmatpush1.msra.mxu0 0.0
    %1356 = vmatprep.subr.mxu0 0.0
    %1357 = vmatpush1.msra.mxu0 0.0
    %1358 = vmatprep.subr.mxu0 0.0
    %1359 = vmatpush1.msra.mxu0 0.0
    %1360 = vmatprep.subr.mxu0 0.0
    %1361 = vmatpush1.msra.mxu0 0.0
    %1362 = vmatprep.subr.mxu0 0.0
    %1363 = vmatpush1.msra.mxu0 0.0
    %1364 = vmatprep.subr.mxu0 0.0
    %1365 = vmatpush1.msra.mxu0 0.0
    %1366 = vmatprep.subr.mxu0 0.0
    %1367 = vmatpush1.msra.mxu0 0.0
    %1368 = vmatprep.subr.mxu0 0.0
    %1369 = vmatpush1.msra.mxu0 0.0
    %1370 = vmatprep.subr.mxu0 0.0
    %1371 = vmatpush1.msra.mxu0 0.0
    %1372 = vmatprep.subr.mxu0 0.0
    %1373 = vmatpush1.msra.mxu0 0.0
    %1374 = vmatprep.subr.mxu0 0.0
    %1375 = vmatpush1.msra.mxu0 0.0
    %1376 = vmatprep.subr.mxu0 0.0
    %1377 = vmatpush1.msra.mxu0 0.0
    %1378 = vmatprep.subr.mxu0 0.0
    %1379 = vmatpush1.msra.mxu0 0.0
    %1380 = vmatprep.subr.mxu0 0.0
    %1381 = vmatpush1.msra.mxu0 0.0
    %1382 = vmatprep.subr.mxu0 0.0
    %1383 = vmatpush1.msra.mxu0 0.0
    %1384 = vmatprep.subr.mxu0 0.0
    %1385 = vmatpush1.msra.mxu0 0.0
    %1386 = vmatprep.subr.mxu0 0.0
    %1387 = vmatpush1.msra.mxu0 0.0
    %1388 = vmatprep.subr.mxu0 0.0
    %1389 = vmatpush1.msra.mxu0 0.0
    %1390 = vmatprep.mubr.f32.mxu0 0.0
    %1391 = vmatmul.mubr.f32.gmra.mrb[0].mxu0 %v1324
    %v1392 = vpop.f32.mrb[0].mxu0
    %v1393 = vadd.f32 0.0, %v1392
    %v1394 = vpop.f32.mrb[0].mxu0
    %1395 = vdwg.mxu0
    %1397 = vrot.lane.b32.xlu0 %v1130, 112
    %v1398 = vpop.permute.xlu0 %1397
    %v1401 = vsel %vm429, %v1312, 0
    %1403 = vmatprep.subr.mxu0 0.0
    %1404 = vmatpush1.msra.mxu0 %v1398
    %1405 = vmatprep.subr.mxu0 0.0
    %1406 = vmatpush1.msra.mxu0 0.0
    %1407 = vmatprep.subr.mxu0 0.0
    %1408 = vmatpush1.msra.mxu0 0.0
    %1409 = vmatprep.subr.mxu0 0.0
    %1410 = vmatpush1.msra.mxu0 0.0
    %1411 = vmatprep.subr.mxu0 0.0
    %1412 = vmatpush1.msra.mxu0 0.0
    %1413 = vmatprep.subr.mxu0 0.0
    %1414 = vmatpush1.msra.mxu0 0.0
    %1415 = vmatprep.subr.mxu0 0.0
    %1416 = vmatpush1.msra.mxu0 0.0
    %1417 = vmatprep.subr.mxu0 0.0
    %1418 = vmatpush1.msra.mxu0 0.0
    %1419 = vmatprep.subr.mxu0 0.0
    %1420 = vmatpush1.msra.mxu0 0.0
    %1421 = vmatprep.subr.mxu0 0.0
    %1422 = vmatpush1.msra.mxu0 0.0
    %1423 = vmatprep.subr.mxu0 0.0
    %1424 = vmatpush1.msra.mxu0 0.0
    %1425 = vmatprep.subr.mxu0 0.0
    %1426 = vmatpush1.msra.mxu0 0.0
    %1427 = vmatprep.subr.mxu0 0.0
    %1428 = vmatpush1.msra.mxu0 0.0
    %1429 = vmatprep.subr.mxu0 0.0
    %1430 = vmatpush1.msra.mxu0 0.0
    %1431 = vmatprep.subr.mxu0 0.0
    %1432 = vmatpush1.msra.mxu0 0.0
    %1433 = vmatprep.subr.mxu0 0.0
    %1434 = vmatpush1.msra.mxu0 0.0
    %1435 = vmatprep.subr.mxu0 0.0
    %1436 = vmatpush1.msra.mxu0 0.0
    %1437 = vmatprep.subr.mxu0 0.0
    %1438 = vmatpush1.msra.mxu0 0.0
    %1439 = vmatprep.subr.mxu0 0.0
    %1440 = vmatpush1.msra.mxu0 0.0
    %1441 = vmatprep.subr.mxu0 0.0
    %1442 = vmatpush1.msra.mxu0 0.0
    %1443 = vmatprep.subr.mxu0 0.0
    %1444 = vmatpush1.msra.mxu0 0.0
    %1445 = vmatprep.subr.mxu0 0.0
    %1446 = vmatpush1.msra.mxu0 0.0
    %1447 = vmatprep.subr.mxu0 0.0
    %1448 = vmatpush1.msra.mxu0 0.0
    %1449 = vmatprep.subr.mxu0 0.0
    %1450 = vmatpush1.msra.mxu0 0.0
    %1451 = vmatprep.subr.mxu0 0.0
    %1452 = vmatpush1.msra.mxu0 0.0
    %1453 = vmatprep.subr.mxu0 0.0
    %1454 = vmatpush1.msra.mxu0 0.0
    %1455 = vmatprep.subr.mxu0 0.0
    %1456 = vmatpush1.msra.mxu0 0.0
    %1457 = vmatprep.subr.mxu0 0.0
    %1458 = vmatpush1.msra.mxu0 0.0
    %1459 = vmatprep.subr.mxu0 0.0
    %1460 = vmatpush1.msra.mxu0 0.0
    %1461 = vmatprep.subr.mxu0 0.0
    %1462 = vmatpush1.msra.mxu0 0.0
    %1463 = vmatprep.subr.mxu0 0.0
    %1464 = vmatpush1.msra.mxu0 0.0
    %1465 = vmatprep.subr.mxu0 0.0
    %1466 = vmatpush1.msra.mxu0 0.0
    %1467 = vmatprep.mubr.f32.mxu0 0.0
    %1468 = vmatmul.mubr.f32.gmra.mrb[0].mxu0 %v1401
    %v1469 = vpop.f32.mrb[0].mxu0
    %v1470 = vadd.f32 0.0, %v1469
    %v1471 = vpop.f32.mrb[0].mxu0
    %1472 = vdwg.mxu0
    %1475 = vrot.lane.b32.xlu0 %v1393, 16
    %v1476 = vpop.permute.xlu0 %1475
    %1477 = vrot.lane.b32.xlu0 %v1470, 16
    %v1478 = vpop.permute.xlu0 %1477
    %vm1481 = vcmask 195712
    %1482 = vst.msk [vmem:[#allocation5] sm:$0xff] %vm1481, %v1476
    %1483 = vst.msk [vmem:[#allocation5 + $0x8] sm:$0xff] %vm1481, %v1478
    %v1484 = vld [vmem:[#allocation2] sm:$0xff]
    %v1485 = vld [vmem:[#allocation2 + $0x8] sm:$0xff]
    %v1486 = vld [vmem:[#allocation3] sm:$0xff]
    %v1487 = vld [vmem:[#allocation3 + $0x8] sm:$0xff]
    %v1488 = vld [vmem:[#allocation4] sm:$0xff]
    %v1489 = vld [vmem:[#allocation4 + $0x8] sm:$0xff]
    %1491 = vrot.lane.b32.xlu0 %v1484, 104
    %v1492 = vpop.permute.xlu0 %1491
    %1494 = vrot.lane.b32.xlu0 %v1486, 104
    %v1495 = vpop.permute.xlu0 %1494
    %v1496 = vsel %vm429, %v1492, 0
    %v1498 = vsel %vm429, %v1495, 0
    %1500 = vmatprep.subr.mxu0 0.0
    %1501 = vmatpush1.xpose.msra.mxu0 %v1498
    %1502 = vmatprep.subr.mxu0 0.0
    %1503 = vmatpush1.xpose.msra.mxu0 0.0
    %1504 = vmatprep.subr.mxu0 0.0
    %1505 = vmatpush1.xpose.msra.mxu0 0.0
    %1506 = vmatprep.subr.mxu0 0.0
    %1507 = vmatpush1.xpose.msra.mxu0 0.0
    %1508 = vmatprep.subr.mxu0 0.0
    %1509 = vmatpush1.xpose.msra.mxu0 0.0
    %1510 = vmatprep.subr.mxu0 0.0
    %1511 = vmatpush1.xpose.msra.mxu0 0.0
    %1512 = vmatprep.subr.mxu0 0.0
    %1513 = vmatpush1.xpose.msra.mxu0 0.0
    %1514 = vmatprep.subr.mxu0 0.0
    %1515 = vmatpush1.xpose.msra.mxu0 0.0
    %1516 = vmatprep.subr.mxu0 0.0
    %1517 = vmatpush1.xpose.msra.mxu0 0.0
    %1518 = vmatprep.subr.mxu0 0.0
    %1519 = vmatpush1.xpose.msra.mxu0 0.0
    %1520 = vmatprep.subr.mxu0 0.0
    %1521 = vmatpush1.xpose.msra.mxu0 0.0
    %1522 = vmatprep.subr.mxu0 0.0
    %1523 = vmatpush1.xpose.msra.mxu0 0.0
    %1524 = vmatprep.subr.mxu0 0.0
    %1525 = vmatpush1.xpose.msra.mxu0 0.0
    %1526 = vmatprep.subr.mxu0 0.0
    %1527 = vmatpush1.xpose.msra.mxu0 0.0
    %1528 = vmatprep.subr.mxu0 0.0
    %1529 = vmatpush1.xpose.msra.mxu0 0.0
    %1530 = vmatprep.subr.mxu0 0.0
    %1531 = vmatpush1.xpose.msra.mxu0 0.0
    %1532 = vmatprep.subr.mxu0 0.0
    %1533 = vmatpush1.xpose.msra.mxu0 0.0
    %1534 = vmatprep.subr.mxu0 0.0
    %1535 = vmatpush1.xpose.msra.mxu0 0.0
    %1536 = vmatprep.subr.mxu0 0.0
    %1537 = vmatpush1.xpose.msra.mxu0 0.0
    %1538 = vmatprep.subr.mxu0 0.0
    %1539 = vmatpush1.xpose.msra.mxu0 0.0
    %1540 = vmatprep.subr.mxu0 0.0
    %1541 = vmatpush1.xpose.msra.mxu0 0.0
    %1542 = vmatprep.subr.mxu0 0.0
    %1543 = vmatpush1.xpose.msra.mxu0 0.0
    %1544 = vmatprep.subr.mxu0 0.0
    %1545 = vmatpush1.xpose.msra.mxu0 0.0
    %1546 = vmatprep.subr.mxu0 0.0
    %1547 = vmatpush1.xpose.msra.mxu0 0.0
    %1548 = vmatprep.subr.mxu0 0.0
    %1549 = vmatpush1.xpose.msra.mxu0 0.0
    %1550 = vmatprep.subr.mxu0 0.0
    %1551 = vmatpush1.xpose.msra.mxu0 0.0
    %1552 = vmatprep.subr.mxu0 0.0
    %1553 = vmatpush1.xpose.msra.mxu0 0.0
    %1554 = vmatprep.subr.mxu0 0.0
    %1555 = vmatpush1.xpose.msra.mxu0 0.0
    %1556 = vmatprep.subr.mxu0 0.0
    %1557 = vmatpush1.xpose.msra.mxu0 0.0
    %1558 = vmatprep.subr.mxu0 0.0
    %1559 = vmatpush1.xpose.msra.mxu0 0.0
    %1560 = vmatprep.subr.mxu0 0.0
    %1561 = vmatpush1.xpose.msra.mxu0 0.0
    %1562 = vmatprep.subr.mxu0 0.0
    %1563 = vmatpush1.xpose.msra.mxu0 0.0
    %1564 = vmatprep.mubr.f32.mxu0 0.0
    %1565 = vmatmul.mubr.f32.gmra.mrb[0].mxu0 %v1496
    %v1566 = vpop.f32.mrb[0].mxu0
    %v1567 = vadd.f32 0.0, %v1566
    %v1568 = vpop.f32.mrb[0].mxu0
    %1569 = vdwg.mxu0
    %1571 = vrot.lane.b32.xlu0 %v1485, 104
    %v1572 = vpop.permute.xlu0 %1571
    %1574 = vrot.lane.b32.xlu0 %v1487, 104
    %v1575 = vpop.permute.xlu0 %1574
    %v1576 = vsel %vm429, %v1572, 0
    %v1578 = vsel %vm429, %v1575, 0
    %1580 = vmatprep.subr.mxu0 0.0
    %1581 = vmatpush1.xpose.msra.mxu0 %v1578
    %1582 = vmatprep.subr.mxu0 0.0
    %1583 = vmatpush1.xpose.msra.mxu0 0.0
    %1584 = vmatprep.subr.mxu0 0.0
    %1585 = vmatpush1.xpose.msra.mxu0 0.0
    %1586 = vmatprep.subr.mxu0 0.0
    %1587 = vmatpush1.xpose.msra.mxu0 0.0
    %1588 = vmatprep.subr.mxu0 0.0
    %1589 = vmatpush1.xpose.msra.mxu0 0.0
    %1590 = vmatprep.subr.mxu0 0.0
    %1591 = vmatpush1.xpose.msra.mxu0 0.0
    %1592 = vmatprep.subr.mxu0 0.0
    %1593 = vmatpush1.xpose.msra.mxu0 0.0
    %1594 = vmatprep.subr.mxu0 0.0
    %1595 = vmatpush1.xpose.msra.mxu0 0.0
    %1596 = vmatprep.subr.mxu0 0.0
    %1597 = vmatpush1.xpose.msra.mxu0 0.0
    %1598 = vmatprep.subr.mxu0 0.0
    %1599 = vmatpush1.xpose.msra.mxu0 0.0
    %1600 = vmatprep.subr.mxu0 0.0
    %1601 = vmatpush1.xpose.msra.mxu0 0.0
    %1602 = vmatprep.subr.mxu0 0.0
    %1603 = vmatpush1.xpose.msra.mxu0 0.0
    %1604 = vmatprep.subr.mxu0 0.0
    %1605 = vmatpush1.xpose.msra.mxu0 0.0
    %1606 = vmatprep.subr.mxu0 0.0
    %1607 = vmatpush1.xpose.msra.mxu0 0.0
    %1608 = vmatprep.subr.mxu0 0.0
    %1609 = vmatpush1.xpose.msra.mxu0 0.0
    %1610 = vmatprep.subr.mxu0 0.0
    %1611 = vmatpush1.xpose.msra.mxu0 0.0
    %1612 = vmatprep.subr.mxu0 0.0
    %1613 = vmatpush1.xpose.msra.mxu0 0.0
    %1614 = vmatprep.subr.mxu0 0.0
    %1615 = vmatpush1.xpose.msra.mxu0 0.0
    %1616 = vmatprep.subr.mxu0 0.0
    %1617 = vmatpush1.xpose.msra.mxu0 0.0
    %1618 = vmatprep.subr.mxu0 0.0
    %1619 = vmatpush1.xpose.msra.mxu0 0.0
    %1620 = vmatprep.subr.mxu0 0.0
    %1621 = vmatpush1.xpose.msra.mxu0 0.0
    %1622 = vmatprep.subr.mxu0 0.0
    %1623 = vmatpush1.xpose.msra.mxu0 0.0
    %1624 = vmatprep.subr.mxu0 0.0
    %1625 = vmatpush1.xpose.msra.mxu0 0.0
    %1626 = vmatprep.subr.mxu0 0.0
    %1627 = vmatpush1.xpose.msra.mxu0 0.0
    %1628 = vmatprep.subr.mxu0 0.0
    %1629 = vmatpush1.xpose.msra.mxu0 0.0
    %1630 = vmatprep.subr.mxu0 0.0
    %1631 = vmatpush1.xpose.msra.mxu0 0.0
    %1632 = vmatprep.subr.mxu0 0.0
    %1633 = vmatpush1.xpose.msra.mxu0 0.0
    %1634 = vmatprep.subr.mxu0 0.0
    %1635 = vmatpush1.xpose.msra.mxu0 0.0
    %1636 = vmatprep.subr.mxu0 0.0
    %1637 = vmatpush1.xpose.msra.mxu0 0.0
    %1638 = vmatprep.subr.mxu0 0.0
    %1639 = vmatpush1.xpose.msra.mxu0 0.0
    %1640 = vmatprep.subr.mxu0 0.0
    %1641 = vmatpush1.xpose.msra.mxu0 0.0
    %1642 = vmatprep.subr.mxu0 0.0
    %1643 = vmatpush1.xpose.msra.mxu0 0.0
    %1644 = vmatprep.mubr.f32.mxu0 0.0
    %1645 = vmatmul.mubr.f32.gmra.mrb[0].mxu0 %v1576
    %v1646 = vpop.f32.mrb[0].mxu0
    %v1647 = vadd.f32 0.0, %v1646
    %v1648 = vpop.f32.mrb[0].mxu0
    %1649 = vdwg.mxu0
    %v1650 = vsel %vm429, %v1567, -inf
    %1651 = vmax.xlane.f32.xlu0 %v1650
    %v1652 = vpop.xlane.xlu0 %1651
    %v1653 = vsel %vm429, %v1647, -inf
    %1654 = vmax.xlane.f32.xlu0 %v1653
    %v1655 = vpop.xlane.xlu0 %1654
    %v1656 = vsub.f32 %v1567, %v1652
    %v1657 = vsub.f32 %v1647, %v1655
    %v1658 = vmul.f32 %v1656, 1.442695
    %v1659 = vpow.pop %v1658
    %v1660 = vmul.f32 %v1657, 1.442695
    %v1661 = vpow.pop %v1660
    %v1662 = vsel %vm429, %v1659, 0.0
    %1663 = vadd.xlane.f32.xlu0 %v1662
    %v1664 = vpop.xlane.xlu0 %1663
    %v1665 = vsel %vm429, %v1661, 0.0
    %1666 = vadd.xlane.f32.xlu0 %v1665
    %v1667 = vpop.xlane.xlu0 %1666
    %v1668 = vrcp.pop %v1664
    %v1669 = vrcp.pop %v1667
    %v1670 = vmul.f32 %v1659, %v1668
    %v1671 = vmul.f32 %v1661, %v1669
    %v1672 = vld [vmem:[#allocation6] sm:$0xff]
    %v1673 = vld [vmem:[#allocation6 + $0x8] sm:$0xff]
    %v1674 = vadd.f32 %v1672, %v1670
    %v1675 = vadd.f32 %v1673, %v1671
    %1676 = vst.msk [vmem:[#allocation6] sm:$0xff] %vm429, %v1674
    %1677 = vst.msk [vmem:[#allocation6 + $0x8] sm:$0xff] %vm429, %v1675
    %1679 = vrot.lane.b32.xlu0 %v1488, 104
    %v1680 = vpop.permute.xlu0 %1679
    %v1683 = vsel %vm429, %v1670, 0
    %1685 = vmatprep.subr.mxu0 0.0
    %1686 = vmatpush1.msra.mxu0 %v1680
    %1687 = vmatprep.subr.mxu0 0.0
    %1688 = vmatpush1.msra.mxu0 0.0
    %1689 = vmatprep.subr.mxu0 0.0
    %1690 = vmatpush1.msra.mxu0 0.0
    %1691 = vmatprep.subr.mxu0 0.0
    %1692 = vmatpush1.msra.mxu0 0.0
    %1693 = vmatprep.subr.mxu0 0.0
    %1694 = vmatpush1.msra.mxu0 0.0
    %1695 = vmatprep.subr.mxu0 0.0
    %1696 = vmatpush1.msra.mxu0 0.0
    %1697 = vmatprep.subr.mxu0 0.0
    %1698 = vmatpush1.msra.mxu0 0.0
    %1699 = vmatprep.subr.mxu0 0.0
    %1700 = vmatpush1.msra.mxu0 0.0
    %1701 = vmatprep.subr.mxu0 0.0
    %1702 = vmatpush1.msra.mxu0 0.0
    %1703 = vmatprep.subr.mxu0 0.0
    %1704 = vmatpush1.msra.mxu0 0.0
    %1705 = vmatprep.subr.mxu0 0.0
    %1706 = vmatpush1.msra.mxu0 0.0
    %1707 = vmatprep.subr.mxu0 0.0
    %1708 = vmatpush1.msra.mxu0 0.0
    %1709 = vmatprep.subr.mxu0 0.0
    %1710 = vmatpush1.msra.mxu0 0.0
    %1711 = vmatprep.subr.mxu0 0.0
    %1712 = vmatpush1.msra.mxu0 0.0
    %1713 = vmatprep.subr.mxu0 0.0
    %1714 = vmatpush1.msra.mxu0 0.0
    %1715 = vmatprep.subr.mxu0 0.0
    %1716 = vmatpush1.msra.mxu0 0.0
    %1717 = vmatprep.subr.mxu0 0.0
    %1718 = vmatpush1.msra.mxu0 0.0
    %1719 = vmatprep.subr.mxu0 0.0
    %1720 = vmatpush1.msra.mxu0 0.0
    %1721 = vmatprep.subr.mxu0 0.0
    %1722 = vmatpush1.msra.mxu0 0.0
    %1723 = vmatprep.subr.mxu0 0.0
    %1724 = vmatpush1.msra.mxu0 0.0
    %1725 = vmatprep.subr.mxu0 0.0
    %1726 = vmatpush1.msra.mxu0 0.0
    %1727 = vmatprep.subr.mxu0 0.0
    %1728 = vmatpush1.msra.mxu0 0.0
    %1729 = vmatprep.subr.mxu0 0.0
    %1730 = vmatpush1.msra.mxu0 0.0
    %1731 = vmatprep.subr.mxu0 0.0
    %1732 = vmatpush1.msra.mxu0 0.0
    %1733 = vmatprep.subr.mxu0 0.0
    %1734 = vmatpush1.msra.mxu0 0.0
    %1735 = vmatprep.subr.mxu0 0.0
    %1736 = vmatpush1.msra.mxu0 0.0
    %1737 = vmatprep.subr.mxu0 0.0
    %1738 = vmatpush1.msra.mxu0 0.0
    %1739 = vmatprep.subr.mxu0 0.0
    %1740 = vmatpush1.msra.mxu0 0.0
    %1741 = vmatprep.subr.mxu0 0.0
    %1742 = vmatpush1.msra.mxu0 0.0
    %1743 = vmatprep.subr.mxu0 0.0
    %1744 = vmatpush1.msra.mxu0 0.0
    %1745 = vmatprep.subr.mxu0 0.0
    %1746 = vmatpush1.msra.mxu0 0.0
    %1747 = vmatprep.subr.mxu0 0.0
    %1748 = vmatpush1.msra.mxu0 0.0
    %1749 = vmatprep.mubr.f32.mxu0 0.0
    %1750 = vmatmul.mubr.f32.gmra.mrb[0].mxu0 %v1683
    %v1751 = vpop.f32.mrb[0].mxu0
    %v1752 = vadd.f32 0.0, %v1751
    %v1753 = vpop.f32.mrb[0].mxu0
    %1754 = vdwg.mxu0
    %1756 = vrot.lane.b32.xlu0 %v1489, 104
    %v1757 = vpop.permute.xlu0 %1756
    %v1760 = vsel %vm429, %v1671, 0
    %1762 = vmatprep.subr.mxu0 0.0
    %1763 = vmatpush1.msra.mxu0 %v1757
    %1764 = vmatprep.subr.mxu0 0.0
    %1765 = vmatpush1.msra.mxu0 0.0
    %1766 = vmatprep.subr.mxu0 0.0
    %1767 = vmatpush1.msra.mxu0 0.0
    %1768 = vmatprep.subr.mxu0 0.0
    %1769 = vmatpush1.msra.mxu0 0.0
    %1770 = vmatprep.subr.mxu0 0.0
    %1771 = vmatpush1.msra.mxu0 0.0
    %1772 = vmatprep.subr.mxu0 0.0
    %1773 = vmatpush1.msra.mxu0 0.0
    %1774 = vmatprep.subr.mxu0 0.0
    %1775 = vmatpush1.msra.mxu0 0.0
    %1776 = vmatprep.subr.mxu0 0.0
    %1777 = vmatpush1.msra.mxu0 0.0
    %1778 = vmatprep.subr.mxu0 0.0
    %1779 = vmatpush1.msra.mxu0 0.0
    %1780 = vmatprep.subr.mxu0 0.0
    %1781 = vmatpush1.msra.mxu0 0.0
    %1782 = vmatprep.subr.mxu0 0.0
    %1783 = vmatpush1.msra.mxu0 0.0
    %1784 = vmatprep.subr.mxu0 0.0
    %1785 = vmatpush1.msra.mxu0 0.0
    %1786 = vmatprep.subr.mxu0 0.0
    %1787 = vmatpush1.msra.mxu0 0.0
    %1788 = vmatprep.subr.mxu0 0.0
    %1789 = vmatpush1.msra.mxu0 0.0
    %1790 = vmatprep.subr.mxu0 0.0
    %1791 = vmatpush1.msra.mxu0 0.0
    %1792 = vmatprep.subr.mxu0 0.0
    %1793 = vmatpush1.msra.mxu0 0.0
    %1794 = vmatprep.subr.mxu0 0.0
    %1795 = vmatpush1.msra.mxu0 0.0
    %1796 = vmatprep.subr.mxu0 0.0
    %1797 = vmatpush1.msra.mxu0 0.0
    %1798 = vmatprep.subr.mxu0 0.0
    %1799 = vmatpush1.msra.mxu0 0.0
    %1800 = vmatprep.subr.mxu0 0.0
    %1801 = vmatpush1.msra.mxu0 0.0
    %1802 = vmatprep.subr.mxu0 0.0
    %1803 = vmatpush1.msra.mxu0 0.0
    %1804 = vmatprep.subr.mxu0 0.0
    %1805 = vmatpush1.msra.mxu0 0.0
    %1806 = vmatprep.subr.mxu0 0.0
    %1807 = vmatpush1.msra.mxu0 0.0
    %1808 = vmatprep.subr.mxu0 0.0
    %1809 = vmatpush1.msra.mxu0 0.0
    %1810 = vmatprep.subr.mxu0 0.0
    %1811 = vmatpush1.msra.mxu0 0.0
    %1812 = vmatprep.subr.mxu0 0.0
    %1813 = vmatpush1.msra.mxu0 0.0
    %1814 = vmatprep.subr.mxu0 0.0
    %1815 = vmatpush1.msra.mxu0 0.0
    %1816 = vmatprep.subr.mxu0 0.0
    %1817 = vmatpush1.msra.mxu0 0.0
    %1818 = vmatprep.subr.mxu0 0.0
    %1819 = vmatpush1.msra.mxu0 0.0
    %1820 = vmatprep.subr.mxu0 0.0
    %1821 = vmatpush1.msra.mxu0 0.0
    %1822 = vmatprep.subr.mxu0 0.0
    %1823 = vmatpush1.msra.mxu0 0.0
    %1824 = vmatprep.subr.mxu0 0.0
    %1825 = vmatpush1.msra.mxu0 0.0
    %1826 = vmatprep.mubr.f32.mxu0 0.0
    %1827 = vmatmul.mubr.f32.gmra.mrb[0].mxu0 %v1760
    %v1828 = vpop.f32.mrb[0].mxu0
    %v1829 = vadd.f32 0.0, %v1828
    %v1830 = vpop.f32.mrb[0].mxu0
    %1831 = vdwg.mxu0
    %1834 = vrot.lane.b32.xlu0 %v1752, 24
    %v1835 = vpop.permute.xlu0 %1834
    %1836 = vrot.lane.b32.xlu0 %v1829, 24
    %v1837 = vpop.permute.xlu0 %1836
    %vm1840 = vcmask 261312
    %1841 = vst.msk [vmem:[#allocation5] sm:$0xff] %vm1840, %v1835
    %1842 = vst.msk [vmem:[#allocation5 + $0x8] sm:$0xff] %vm1840, %v1837
    %v1843 = vld [vmem:[#allocation5] sm:$0xff]
    %v1844 = vld [vmem:[#allocation5 + $0x8] sm:$0xff]
    %v1845 = vld [vmem:[%s9] sm:$0xff]
    %v1846 = vld [vmem:[%s9 + $0x8] sm:$0xff]
    %v1847 = vld [vmem:[%s9 + $0x10] sm:$0xff]
    %v1848 = vld [vmem:[%s9 + $0x18] sm:$0xff]
    %v1849 = vld [vmem:[%s10] sm:$0x1]
    %v1851 = vlaneseq
    %v1852 = vshrl.u32 %v1851, 7
    %v1853 = vsub.s32 0, %v1852
    %v1854 = vrot.slane %v1849, %v1853
    %v1857 = vsel %vm345, %v1843, 0
    %v1860 = vsel %vm345, %v1844, 0
    %1862 = vmatprep.subr.mxu0 0.0
    %1863 = vmatpush1.msra.mxu0 %v1845
    %1864 = vmatprep.subr.mxu0 0.0
    %1865 = vmatpush1.msra.mxu0 %v1846
    %1866 = vmatprep.subr.mxu0 0.0
    %1867 = vmatpush1.msra.mxu0 %v1847
    %1868 = vmatprep.subr.mxu0 0.0
    %1869 = vmatpush1.msra.mxu0 %v1848
    %1870 = vmatprep.subr.mxu0 0.0
    %1871 = vmatpush1.msra.mxu0 0.0
    %1872 = vmatprep.subr.mxu0 0.0
    %1873 = vmatpush1.msra.mxu0 0.0
    %1874 = vmatprep.subr.mxu0 0.0
    %1875 = vmatpush1.msra.mxu0 0.0
    %1876 = vmatprep.subr.mxu0 0.0
    %1877 = vmatpush1.msra.mxu0 0.0
    %1878 = vmatprep.subr.mxu0 0.0
    %1879 = vmatpush1.msra.mxu0 0.0
    %1880 = vmatprep.subr.mxu0 0.0
    %1881 = vmatpush1.msra.mxu0 0.0
    %1882 = vmatprep.subr.mxu0 0.0
    %1883 = vmatpush1.msra.mxu0 0.0
    %1884 = vmatprep.subr.mxu0 0.0
    %1885 = vmatpush1.msra.mxu0 0.0
    %1886 = vmatprep.subr.mxu0 0.0
    %1887 = vmatpush1.msra.mxu0 0.0
    %1888 = vmatprep.subr.mxu0 0.0
    %1889 = vmatpush1.msra.mxu0 0.0
    %1890 = vmatprep.subr.mxu0 0.0
    %1891 = vmatpush1.msra.mxu0 0.0
    %1892 = vmatprep.subr.mxu0 0.0
    %1893 = vmatpush1.msra.mxu0 0.0
    %1894 = vmatprep.subr.mxu0 0.0
    %1895 = vmatpush1.msra.mxu0 0.0
    %1896 = vmatprep.subr.mxu0 0.0
    %1897 = vmatpush1.msra.mxu0 0.0
    %1898 = vmatprep.subr.mxu0 0.0
    %1899 = vmatpush1.msra.mxu0 0.0
    %1900 = vmatprep.subr.mxu0 0.0
    %1901 = vmatpush1.msra.mxu0 0.0
    %1902 = vmatprep.subr.mxu0 0.0
    %1903 = vmatpush1.msra.mxu0 0.0
    %1904 = vmatprep.subr.mxu0 0.0
    %1905 = vmatpush1.msra.mxu0 0.0
    %1906 = vmatprep.subr.mxu0 0.0
    %1907 = vmatpush1.msra.mxu0 0.0
    %1908 = vmatprep.subr.mxu0 0.0
    %1909 = vmatpush1.msra.mxu0 0.0
    %1910 = vmatprep.subr.mxu0 0.0
    %1911 = vmatpush1.msra.mxu0 0.0
    %1912 = vmatprep.subr.mxu0 0.0
    %1913 = vmatpush1.msra.mxu0 0.0
    %1914 = vmatprep.subr.mxu0 0.0
    %1915 = vmatpush1.msra.mxu0 0.0
    %1916 = vmatprep.subr.mxu0 0.0
    %1917 = vmatpush1.msra.mxu0 0.0
    %1918 = vmatprep.subr.mxu0 0.0
    %1919 = vmatpush1.msra.mxu0 0.0
    %1920 = vmatprep.subr.mxu0 0.0
    %1921 = vmatpush1.msra.mxu0 0.0
    %1922 = vmatprep.subr.mxu0 0.0
    %1923 = vmatpush1.msra.mxu0 0.0
    %1924 = vmatprep.subr.mxu0 0.0
    %1925 = vmatpush1.msra.mxu0 0.0
    %1926 = vmatprep.mubr.f32.mxu0 0.0
    %1927 = vmatmul.mubr.f32.gmra.mrb[0].mxu0 %v1857
    %v1928 = vpop.f32.mrb[0].mxu0
    %v1929 = vadd.f32 %v1854, %v1928
    %v1930 = vpop.f32.mrb[0].mxu0
    %1931 = vmatprep.mubr.f32.mxu0 0.0
    %1932 = vmatmul.mubr.f32.gmra.mrb[0].mxu0 %v1860
    %v1933 = vpop.f32.mrb[0].mxu0
    %v1934 = vadd.f32 %v1854, %v1933
    %v1935 = vpop.f32.mrb[0].mxu0
    %1936 = vdwg.mxu0
    %1937 = vst.msk [vmem:[#allocation19] sm:$0xff] %vm345, %v1929
    %1938 = vst.msk [vmem:[#allocation19 + $0x8] sm:$0xff] %vm345, %v1934
    %v1939 = vld [vmem:[#allocation6] sm:$0xff]
    %v1940 = vld [vmem:[#allocation6 + $0x8] sm:$0xff]
    %v1941 = vmul.f32 %v1939, 0.25
    %v1942 = vmul.f32 %v1940, 0.25
    %1943 = vst.msk [vmem:[#allocation20] sm:$0xff] %vm429, %v1941
    %1944 = vst.msk [vmem:[#allocation20 + $0x8] sm:$0xff] %vm429, %v1942
    // Predicated region
    $region78: #{tpu_custom_call.1} parent=1 // pred_check
      _
    $region79: #{tpu_custom_call.1} parent=1 // pred_check_branch
      %1946 = sbr.rel (0) target = $region81
    $region80: #{tpu_custom_call.1} parent=1 // pred_region
      %s1948 = ssub.s32 256, 256
      %1949 = vsyncadd [#allocation9], %s1948
      %s1950 = sshll.u32 [#allocation19], 4
      %s1951 = int_to_ptr.vmem [resolvable:$true] %s1950
      %1956 = dma.vmem_to_hbm [thread:$0]  %s1951, 256, %s11, [#allocation9], 128, 128, 8
    $region81: #{tpu_custom_call.1} parent=1 // pred_fallthru
      _
    // Predicated region
    $region82: #{tpu_custom_call.1} parent=1 // pred_check
      _
    $region83: #{tpu_custom_call.1} parent=1 // pred_check_branch
      %1958 = sbr.rel (0) target = $region85
    $region84: #{tpu_custom_call.1} parent=1 // pred_region
      %s1960 = ssub.s32 256, 256
      %1961 = vsyncadd [#allocation21], %s1960
      %s1962 = sshll.u32 [#allocation20], 4
      %s1963 = int_to_ptr.vmem [resolvable:$true] %s1962
      %1968 = dma.vmem_to_hbm [thread:$0]  %s1963, 256, %s12, [#allocation21], 128, 128, 8
    $region85: #{tpu_custom_call.1} parent=1 // pred_fallthru
      _
    // Predicated region
    $region86: #{tpu_custom_call.1} parent=1 // pred_check
      _
    $region87: #{tpu_custom_call.1} parent=1 // pred_check_branch
      %1970 = sbr.rel (0) target = $region89
    $region88: #{tpu_custom_call.1} parent=1 // pred_region
      %1971 = dma.done [#allocation9], 256
    $region89: #{tpu_custom_call.1} parent=1 // pred_fallthru
      _
    // Predicated region
    $region90: #{tpu_custom_call.1} parent=1 // pred_check
      _
    $region91: #{tpu_custom_call.1} parent=1 // pred_check_branch
      %1973 = sbr.rel (0) target = $region93
    $region92: #{tpu_custom_call.1} parent=1 // pred_region
      %1974 = dma.done [#allocation21], 256
    $region93: #{tpu_custom_call.1} parent=1 // pred_fallthru
      _
    %1975 = vsyncpa [#allocation8], 1
    %1976 = vsyncpa [#allocation11], 1
    %1977 = vsyncpa [#allocation14], 1
    %1978 = vsyncpa [#allocation17], 1
    %1979 = vsyncpa [#allocation9], 1
    %1980 = vsyncpa [#allocation21], 1

</llo_original>
